<compile_context>
chip_gen: v7x
topology: tpu7x:2x2x1
jax: 0.10.0
libtpu: 0.0.40
codegen_flags: <defaults>
</compile_context>

<pallas_src>
import math

import jax
import jax.numpy as jnp
from jax.experimental import pallas as pl
from jax.experimental.pallas import tpu as pltpu


def _make_conv3x3_kernel(C_in, C_out, TH, W, negative_slope):
    """3x3 stride-1 conv + bias + LeakyReLU on one (TH, W) row block."""

    def kernel(x0_ref, x1_ref, x2_ref, w_ref, b_ref, o_ref):
        # x{kh}_ref: (1, TH, W+2, C_in) f32 — rows [r0+kh, r0+kh+TH) of the
        #            zero-padded NHWC input (the kh tap is baked into which
        #            of the three shifted views we read).
        # w_ref:     (9, C_in, C_out) f32, resident (constant index_map).
        # b_ref:     (1, C_out)       f32, resident.
        # o_ref:     (1, TH*W, C_out) — rows [r0*W, (r0+TH)*W) of (B, H*W, C_out).
        x_refs = (x0_ref, x1_ref, x2_ref)
        acc = jnp.zeros((TH * W, C_out), jnp.float32)
        for kh in range(3):
            for kw in range(3):
                # Static column window -> (TH, W, C_in); collapsing the pixel
                # dims is layout-preserving when W % 8 == 0 (typical widths).
                tap = x_refs[kh][0, :, kw:kw + W, :].reshape(TH * W, C_in)
                acc = acc + jnp.dot(tap, w_ref[3 * kh + kw],
                                    preferred_element_type=jnp.float32)
        acc = acc + b_ref[...]                                    # bias
        acc = jnp.where(acc >= 0.0, acc, negative_slope * acc)    # LeakyReLU
        o_ref[0] = acc.astype(o_ref.dtype)

    return kernel


def _pick_row_block(B, H, W, row_tile_pixels, min_steps=8):
    """Largest divisor of H with TH*W <= row_tile_pixels, preferring
    8-aligned pixel counts and >= min_steps total grid steps."""
    divisors = [d for d in range(1, H + 1) if H % d == 0]
    fit = [d for d in divisors if d * W <= row_tile_pixels] or [1]
    aligned = [d for d in fit if (d * W) % 8 == 0] or fit
    for d in reversed(aligned):                 # largest first
        if B * (H // d) >= min_steps:
            return d
    return aligned[-1]                          # can't reach min_steps: go big


def input_proj(x, weight, bias, *, negative_slope=0.01, row_tile_pixels=4096):
    """x: (B, C_in, H, W); weight: (C_out, C_in, 3, 3) OIHW; bias: (C_out,).
    Returns (B, H*W, C_out) = LeakyReLU(Conv2d(x)).flatten(2).transpose(1, 2)."""
    B, C_in, H, W = x.shape
    C_out = weight.shape[0]

    # NHWC + 1-pixel zero halo; three row-shifted views (one per kh tap).
    xp = jnp.pad(jnp.transpose(x, (0, 2, 3, 1)).astype(jnp.float32),
                 ((0, 0), (1, 1), (1, 1), (0, 0)))           # (B, H+2, W+2, C_in)
    x_sh = [xp[:, kh:kh + H, :, :] for kh in range(3)]       # (B, H, W+2, C_in)

    # Per-tap weights, pre-transposed for (pixels, C_in) @ (C_in, C_out).
    w_taps = jnp.transpose(weight.astype(jnp.float32), (2, 3, 1, 0))
    w_taps = w_taps.reshape(9, C_in, C_out)                  # [kh*3+kw] -> (C_in, C_out)
    b_row = bias.reshape(1, C_out).astype(jnp.float32)

    TH = _pick_row_block(B, H, W, row_tile_pixels)
    grid = (B, H // TH)

    x_spec = pl.BlockSpec((1, TH, W + 2, C_in), lambda b, i: (b, i, 0, 0))
    in_specs = [
        x_spec, x_spec, x_spec,
        pl.BlockSpec((9, C_in, C_out), lambda b, i: (0, 0, 0)),   # resident
        pl.BlockSpec((1, C_out), lambda b, i: (0, 0)),            # resident
    ]
    out_specs = pl.BlockSpec((1, TH * W, C_out), lambda b, i: (b, i, 0))

    cost = pl.CostEstimate(
        flops=2 * B * H * W * C_out * C_in * 9,
        transcendentals=0,
        bytes_accessed=(3 * B * H * (W + 2) * C_in        # shifted inputs
                        + 9 * C_in * C_out + C_out        # weights + bias
                        + B * H * W * C_out) * 4,         # output
    )

    out = pl.pallas_call(
        _make_conv3x3_kernel(C_in, C_out, TH, W, negative_slope),
        out_shape=jax.ShapeDtypeStruct((B, H * W, C_out), x.dtype),
        grid=grid,
        in_specs=in_specs,
        out_specs=out_specs,
        compiler_params=pltpu.CompilerParams(
            dimension_semantics=("parallel", "parallel"),
            vmem_limit_bytes=32 * 1024 * 1024),
        cost_estimate=cost,
    )(x_sh[0], x_sh[1], x_sh[2], w_taps, b_row)

    # TODO(synk): norm_layer is None in the reference module; a LayerNorm
    # epilogue would be fused into the kernel here if a norm were configured.
    return out                                            # (B, H*W, C_out)


if __name__ == "__main__":
    key = jax.random.PRNGKey(0)
    k1, k2, k3 = jax.random.split(key, 3)

    # Small shapes consistent with the module: B=2, C_in=4, H=W=16, C_out=32.
    B, C_in, H, W, C_out = 2, 4, 16, 16, 32
    L = H * W

    x = jax.random.normal(k1, (B, C_in, H, W), dtype=jnp.float32)

    # Deterministic Conv2d-style init (uniform in +-1/sqrt(fan_in)).
    fan_in = C_in * 3 * 3
    bound = 1.0 / math.sqrt(fan_in)
    weight = jax.random.uniform(k2, (C_out, C_in, 3, 3), jnp.float32, -bound, bound)
    bias = jax.random.uniform(k3, (C_out,), jnp.float32, -bound, bound)

    fn = jax.jit(input_proj)
    out = jax.block_until_ready(fn(x, weight, bias))

    # Reference: XLA conv + bias + LeakyReLU with identical semantics.
    ref_img = jax.lax.conv_general_dilated(
        x, weight, window_strides=(1, 1), padding=((1, 1), (1, 1)),
        dimension_numbers=("NCHW", "OIHW", "NCHW"),
        precision=jax.lax.Precision.HIGHEST)
    ref_img = ref_img + bias.reshape(1, C_out, 1, 1)
    ref_img = jnp.where(ref_img >= 0.0, ref_img, 0.01 * ref_img)
    ref = ref_img.reshape(B, C_out, L).transpose(0, 2, 1)   # (B, L, C_out)

    assert out.shape == (B, L, C_out), out.shape
    max_err = float(jnp.max(jnp.abs(out - ref)))
    # f32 operands; tolerance still covers a bf16-pass MXU accumulation.
    assert jnp.allclose(out, ref, atol=3e-2, rtol=3e-2), max_err

    print("KERNEL_OK")
</pallas_src>

<mosaic_0001>
module attributes {stable_mosaic.version = 11 : i64} {
  func.func @kernel(%arg0: i32, %arg1: i32, %arg2: memref<1x4x18x4xf32, #tpu.memory_space<vmem>>, %arg3: memref<1x4x18x4xf32, #tpu.memory_space<vmem>>, %arg4: memref<1x4x18x4xf32, #tpu.memory_space<vmem>>, %arg5: memref<9x4x32xf32, #tpu.memory_space<vmem>>, %arg6: memref<1x32xf32, #tpu.memory_space<vmem>>, %arg7: memref<1x64x32xf32, #tpu.memory_space<vmem>>) attributes {dimension_semantics = [#tpu.dimension_semantics<parallel>, #tpu.dimension_semantics<parallel>], iteration_bounds = array<i64: 2, 4>, scalar_prefetch = 0 : i64, scratch_operands = 0 : i64, tpu.core_type = #tpu.core_type<tc>, window_params = [{transform_indices = @transform_0, window_bounds = array<i64: 1, 4, 18, 4>}, {transform_indices = @transform_1, window_bounds = array<i64: 1, 4, 18, 4>}, {transform_indices = @transform_2, window_bounds = array<i64: 1, 4, 18, 4>}, {pipeline_mode = #tpu.pipeline_mode<synchronous>, transform_indices = @transform_3, window_bounds = array<i64: 9, 4, 32>}, {pipeline_mode = #tpu.pipeline_mode<synchronous>, transform_indices = @transform_4, window_bounds = array<i64: 1, 32>}, {transform_indices = @transform_5, window_bounds = array<i64: 1, 64, 32>}]} {
    %cst = arith.constant 0.000000e+00 : f32
    %0 = vector.broadcast %cst : f32 to vector<64x32xf32>
    %c0 = arith.constant 0 : index
    %c0_0 = arith.constant 0 : index
    %c0_1 = arith.constant 0 : index
    %c0_2 = arith.constant 0 : index
    %1 = vector.load %arg2[%c0, %c0_0, %c0_1, %c0_2] : memref<1x4x18x4xf32, #tpu.memory_space<vmem>>, vector<1x4x16x4xf32>
    %2 = vector.shape_cast %1 : vector<1x4x16x4xf32> to vector<4x16x4xf32>
    %3 = vector.shape_cast %2 : vector<4x16x4xf32> to vector<64x4xf32>
    %c0_3 = arith.constant 0 : index
    %c0_4 = arith.constant 0 : index
    %c0_5 = arith.constant 0 : index
    %4 = vector.load %arg5[%c0_3, %c0_4, %c0_5] : memref<9x4x32xf32, #tpu.memory_space<vmem>>, vector<1x4x32xf32>
    %5 = vector.shape_cast %4 : vector<1x4x32xf32> to vector<4x32xf32>
    %cst_6 = arith.constant dense<0.000000e+00> : vector<64x32xf32>
    %6 = tpu.matmul %3, %5, %cst_6 {dimension_numbers = #tpu.dot_dimension_numbers<[1], [0], [0], [1], [0, 0, 1, 1], [], []>} : vector<64x4xf32>, vector<4x32xf32>, vector<64x32xf32> -> vector<64x32xf32>
    %7 = arith.addf %0, %6 : vector<64x32xf32>
    %c0_7 = arith.constant 0 : index
    %c0_8 = arith.constant 0 : index
    %c1 = arith.constant 1 : index
    %c0_9 = arith.constant 0 : index
    %8 = vector.load %arg2[%c0_7, %c0_8, %c1, %c0_9] : memref<1x4x18x4xf32, #tpu.memory_space<vmem>>, vector<1x4x16x4xf32>
    %9 = vector.shape_cast %8 : vector<1x4x16x4xf32> to vector<4x16x4xf32>
    %10 = vector.shape_cast %9 : vector<4x16x4xf32> to vector<64x4xf32>
    %c1_10 = arith.constant 1 : index
    %c0_11 = arith.constant 0 : index
    %c0_12 = arith.constant 0 : index
    %11 = vector.load %arg5[%c1_10, %c0_11, %c0_12] : memref<9x4x32xf32, #tpu.memory_space<vmem>>, vector<1x4x32xf32>
    %12 = vector.shape_cast %11 : vector<1x4x32xf32> to vector<4x32xf32>
    %cst_13 = arith.constant dense<0.000000e+00> : vector<64x32xf32>
    %13 = tpu.matmul %10, %12, %cst_13 {dimension_numbers = #tpu.dot_dimension_numbers<[1], [0], [0], [1], [0, 0, 1, 1], [], []>} : vector<64x4xf32>, vector<4x32xf32>, vector<64x32xf32> -> vector<64x32xf32>
    %14 = arith.addf %7, %13 : vector<64x32xf32>
    %c0_14 = arith.constant 0 : index
    %c0_15 = arith.constant 0 : index
    %c2 = arith.constant 2 : index
    %c0_16 = arith.constant 0 : index
    %15 = vector.load %arg2[%c0_14, %c0_15, %c2, %c0_16] : memref<1x4x18x4xf32, #tpu.memory_space<vmem>>, vector<1x4x16x4xf32>
    %16 = vector.shape_cast %15 : vector<1x4x16x4xf32> to vector<4x16x4xf32>
    %17 = vector.shape_cast %16 : vector<4x16x4xf32> to vector<64x4xf32>
    %c2_17 = arith.constant 2 : index
    %c0_18 = arith.constant 0 : index
    %c0_19 = arith.constant 0 : index
    %18 = vector.load %arg5[%c2_17, %c0_18, %c0_19] : memref<9x4x32xf32, #tpu.memory_space<vmem>>, vector<1x4x32xf32>
    %19 = vector.shape_cast %18 : vector<1x4x32xf32> to vector<4x32xf32>
    %cst_20 = arith.constant dense<0.000000e+00> : vector<64x32xf32>
    %20 = tpu.matmul %17, %19, %cst_20 {dimension_numbers = #tpu.dot_dimension_numbers<[1], [0], [0], [1], [0, 0, 1, 1], [], []>} : vector<64x4xf32>, vector<4x32xf32>, vector<64x32xf32> -> vector<64x32xf32>
    %21 = arith.addf %14, %20 : vector<64x32xf32>
    %c0_21 = arith.constant 0 : index
    %c0_22 = arith.constant 0 : index
    %c0_23 = arith.constant 0 : index
    %c0_24 = arith.constant 0 : index
    %22 = vector.load %arg3[%c0_21, %c0_22, %c0_23, %c0_24] : memref<1x4x18x4xf32, #tpu.memory_space<vmem>>, vector<1x4x16x4xf32>
    %23 = vector.shape_cast %22 : vector<1x4x16x4xf32> to vector<4x16x4xf32>
    %24 = vector.shape_cast %23 : vector<4x16x4xf32> to vector<64x4xf32>
    %c3 = arith.constant 3 : index
    %c0_25 = arith.constant 0 : index
    %c0_26 = arith.constant 0 : index
    %25 = vector.load %arg5[%c3, %c0_25, %c0_26] : memref<9x4x32xf32, #tpu.memory_space<vmem>>, vector<1x4x32xf32>
    %26 = vector.shape_cast %25 : vector<1x4x32xf32> to vector<4x32xf32>
    %cst_27 = arith.constant dense<0.000000e+00> : vector<64x32xf32>
    %27 = tpu.matmul %24, %26, %cst_27 {dimension_numbers = #tpu.dot_dimension_numbers<[1], [0], [0], [1], [0, 0, 1, 1], [], []>} : vector<64x4xf32>, vector<4x32xf32>, vector<64x32xf32> -> vector<64x32xf32>
    %28 = arith.addf %21, %27 : vector<64x32xf32>
    %c0_28 = arith.constant 0 : index
    %c0_29 = arith.constant 0 : index
    %c1_30 = arith.constant 1 : index
    %c0_31 = arith.constant 0 : index
    %29 = vector.load %arg3[%c0_28, %c0_29, %c1_30, %c0_31] : memref<1x4x18x4xf32, #tpu.memory_space<vmem>>, vector<1x4x16x4xf32>
    %30 = vector.shape_cast %29 : vector<1x4x16x4xf32> to vector<4x16x4xf32>
    %31 = vector.shape_cast %30 : vector<4x16x4xf32> to vector<64x4xf32>
    %c4 = arith.constant 4 : index
    %c0_32 = arith.constant 0 : index
    %c0_33 = arith.constant 0 : index
    %32 = vector.load %arg5[%c4, %c0_32, %c0_33] : memref<9x4x32xf32, #tpu.memory_space<vmem>>, vector<1x4x32xf32>
    %33 = vector.shape_cast %32 : vector<1x4x32xf32> to vector<4x32xf32>
    %cst_34 = arith.constant dense<0.000000e+00> : vector<64x32xf32>
    %34 = tpu.matmul %31, %33, %cst_34 {dimension_numbers = #tpu.dot_dimension_numbers<[1], [0], [0], [1], [0, 0, 1, 1], [], []>} : vector<64x4xf32>, vector<4x32xf32>, vector<64x32xf32> -> vector<64x32xf32>
    %35 = arith.addf %28, %34 : vector<64x32xf32>
    %c0_35 = arith.constant 0 : index
    %c0_36 = arith.constant 0 : index
    %c2_37 = arith.constant 2 : index
    %c0_38 = arith.constant 0 : index
    %36 = vector.load %arg3[%c0_35, %c0_36, %c2_37, %c0_38] : memref<1x4x18x4xf32, #tpu.memory_space<vmem>>, vector<1x4x16x4xf32>
    %37 = vector.shape_cast %36 : vector<1x4x16x4xf32> to vector<4x16x4xf32>
    %38 = vector.shape_cast %37 : vector<4x16x4xf32> to vector<64x4xf32>
    %c5 = arith.constant 5 : index
    %c0_39 = arith.constant 0 : index
    %c0_40 = arith.constant 0 : index
    %39 = vector.load %arg5[%c5, %c0_39, %c0_40] : memref<9x4x32xf32, #tpu.memory_space<vmem>>, vector<1x4x32xf32>
    %40 = vector.shape_cast %39 : vector<1x4x32xf32> to vector<4x32xf32>
    %cst_41 = arith.constant dense<0.000000e+00> : vector<64x32xf32>
    %41 = tpu.matmul %38, %40, %cst_41 {dimension_numbers = #tpu.dot_dimension_numbers<[1], [0], [0], [1], [0, 0, 1, 1], [], []>} : vector<64x4xf32>, vector<4x32xf32>, vector<64x32xf32> -> vector<64x32xf32>
    %42 = arith.addf %35, %41 : vector<64x32xf32>
    %c0_42 = arith.constant 0 : index
    %c0_43 = arith.constant 0 : index
    %c0_44 = arith.constant 0 : index
    %c0_45 = arith.constant 0 : index
    %43 = vector.load %arg4[%c0_42, %c0_43, %c0_44, %c0_45] : memref<1x4x18x4xf32, #tpu.memory_space<vmem>>, vector<1x4x16x4xf32>
    %44 = vector.shape_cast %43 : vector<1x4x16x4xf32> to vector<4x16x4xf32>
    %45 = vector.shape_cast %44 : vector<4x16x4xf32> to vector<64x4xf32>
    %c6 = arith.constant 6 : index
    %c0_46 = arith.constant 0 : index
    %c0_47 = arith.constant 0 : index
    %46 = vector.load %arg5[%c6, %c0_46, %c0_47] : memref<9x4x32xf32, #tpu.memory_space<vmem>>, vector<1x4x32xf32>
    %47 = vector.shape_cast %46 : vector<1x4x32xf32> to vector<4x32xf32>
    %cst_48 = arith.constant dense<0.000000e+00> : vector<64x32xf32>
    %48 = tpu.matmul %45, %47, %cst_48 {dimension_numbers = #tpu.dot_dimension_numbers<[1], [0], [0], [1], [0, 0, 1, 1], [], []>} : vector<64x4xf32>, vector<4x32xf32>, vector<64x32xf32> -> vector<64x32xf32>
    %49 = arith.addf %42, %48 : vector<64x32xf32>
    %c0_49 = arith.constant 0 : index
    %c0_50 = arith.constant 0 : index
    %c1_51 = arith.constant 1 : index
    %c0_52 = arith.constant 0 : index
    %50 = vector.load %arg4[%c0_49, %c0_50, %c1_51, %c0_52] : memref<1x4x18x4xf32, #tpu.memory_space<vmem>>, vector<1x4x16x4xf32>
    %51 = vector.shape_cast %50 : vector<1x4x16x4xf32> to vector<4x16x4xf32>
    %52 = vector.shape_cast %51 : vector<4x16x4xf32> to vector<64x4xf32>
    %c7 = arith.constant 7 : index
    %c0_53 = arith.constant 0 : index
    %c0_54 = arith.constant 0 : index
    %53 = vector.load %arg5[%c7, %c0_53, %c0_54] : memref<9x4x32xf32, #tpu.memory_space<vmem>>, vector<1x4x32xf32>
    %54 = vector.shape_cast %53 : vector<1x4x32xf32> to vector<4x32xf32>
    %cst_55 = arith.constant dense<0.000000e+00> : vector<64x32xf32>
    %55 = tpu.matmul %52, %54, %cst_55 {dimension_numbers = #tpu.dot_dimension_numbers<[1], [0], [0], [1], [0, 0, 1, 1], [], []>} : vector<64x4xf32>, vector<4x32xf32>, vector<64x32xf32> -> vector<64x32xf32>
    %56 = arith.addf %49, %55 : vector<64x32xf32>
    %c0_56 = arith.constant 0 : index
    %c0_57 = arith.constant 0 : index
    %c2_58 = arith.constant 2 : index
    %c0_59 = arith.constant 0 : index
    %57 = vector.load %arg4[%c0_56, %c0_57, %c2_58, %c0_59] : memref<1x4x18x4xf32, #tpu.memory_space<vmem>>, vector<1x4x16x4xf32>
    %58 = vector.shape_cast %57 : vector<1x4x16x4xf32> to vector<4x16x4xf32>
    %59 = vector.shape_cast %58 : vector<4x16x4xf32> to vector<64x4xf32>
    %c8 = arith.constant 8 : index
    %c0_60 = arith.constant 0 : index
    %c0_61 = arith.constant 0 : index
    %60 = vector.load %arg5[%c8, %c0_60, %c0_61] : memref<9x4x32xf32, #tpu.memory_space<vmem>>, vector<1x4x32xf32>
    %61 = vector.shape_cast %60 : vector<1x4x32xf32> to vector<4x32xf32>
    %cst_62 = arith.constant dense<0.000000e+00> : vector<64x32xf32>
    %62 = tpu.matmul %59, %61, %cst_62 {dimension_numbers = #tpu.dot_dimension_numbers<[1], [0], [0], [1], [0, 0, 1, 1], [], []>} : vector<64x4xf32>, vector<4x32xf32>, vector<64x32xf32> -> vector<64x32xf32>
    %63 = arith.addf %56, %62 : vector<64x32xf32>
    %c0_63 = arith.constant 0 : index
    %c0_64 = arith.constant 0 : index
    %64 = vector.load %arg6[%c0_63, %c0_64] : memref<1x32xf32, #tpu.memory_space<vmem>>, vector<1x32xf32>
    %65 = vector.broadcast %64 : vector<1x32xf32> to vector<64x32xf32>
    %66 = arith.addf %63, %65 : vector<64x32xf32>
    %cst_65 = arith.constant 0.000000e+00 : f32
    %67 = vector.broadcast %cst_65 : f32 to vector<64x32xf32>
    %68 = arith.cmpf oge, %66, %67 : vector<64x32xf32>
    %cst_66 = arith.constant 0.00999999977 : f32
    %69 = vector.broadcast %cst_66 : f32 to vector<64x32xf32>
    %70 = arith.mulf %69, %66 : vector<64x32xf32>
    %71 = arith.select %68, %66, %70 : vector<64x32xi1>, vector<64x32xf32>
    %c0_67 = arith.constant 0 : index
    %c0_68 = arith.constant 0 : index
    %c0_69 = arith.constant 0 : index
    %72 = vector.load %arg7[%c0_67, %c0_68, %c0_69] : memref<1x64x32xf32, #tpu.memory_space<vmem>>, vector<1x64x32xf32>
    %73 = vector.shape_cast %72 : vector<1x64x32xf32> to vector<64x32xf32>
    %74 = vector.shape_cast %71 : vector<64x32xf32> to vector<1x64x32xf32>
    tpu.vector_store %arg7[%c0_67, %c0_68, %c0_69], %74 {strides = array<i32>} : memref<1x64x32xf32, #tpu.memory_space<vmem>>, vector<1x64x32xf32>,
    return
  }
  func.func @transform_0(%arg0: i32, %arg1: i32) -> (i32, i32, i32, i32) {
    %c0_i32 = arith.constant 0 : i32
    %c0_i32_0 = arith.constant 0 : i32
    %c0_i32_1 = arith.constant 0 : i32
    return %arg0, %arg1, %c0_i32, %c0_i32_0 : i32, i32, i32, i32
  }
  func.func @transform_1(%arg0: i32, %arg1: i32) -> (i32, i32, i32, i32) {
    %c0_i32 = arith.constant 0 : i32
    %c0_i32_0 = arith.constant 0 : i32
    %c0_i32_1 = arith.constant 0 : i32
    return %arg0, %arg1, %c0_i32, %c0_i32_0 : i32, i32, i32, i32
  }
  func.func @transform_2(%arg0: i32, %arg1: i32) -> (i32, i32, i32, i32) {
    %c0_i32 = arith.constant 0 : i32
    %c0_i32_0 = arith.constant 0 : i32
    %c0_i32_1 = arith.constant 0 : i32
    return %arg0, %arg1, %c0_i32, %c0_i32_0 : i32, i32, i32, i32
  }
  func.func @transform_3(%arg0: i32, %arg1: i32) -> (i32, i32, i32) {
    %c0_i32 = arith.constant 0 : i32
    %c0_i32_0 = arith.constant 0 : i32
    %c0_i32_1 = arith.constant 0 : i32
    %c0_i32_2 = arith.constant 0 : i32
    return %c0_i32, %c0_i32_0, %c0_i32_1 : i32, i32, i32
  }
  func.func @transform_4(%arg0: i32, %arg1: i32) -> (i32, i32) {
    %c0_i32 = arith.constant 0 : i32
    %c0_i32_0 = arith.constant 0 : i32
    %c0_i32_1 = arith.constant 0 : i32
    return %c0_i32, %c0_i32_0 : i32, i32
  }
  func.func @transform_5(%arg0: i32, %arg1: i32) -> (i32, i32, i32) {
    %c0_i32 = arith.constant 0 : i32
    %c0_i32_0 = arith.constant 0 : i32
    return %arg0, %arg1, %c0_i32 : i32, i32, i32
  }
}

</mosaic_0001>

<llo_original>
// kernel: input_proj.1
$region0: #{input_proj.1}
  #allocation0 [shape = 'u32[]', space=smem, size = 0x4, offset = 0x4, fixed_abs, tag = 'smem constant byte address 0x4 - core index']
  #allocation1 [shape = 'u32[144,128]{1,0:T(1,128)}', space=vmem, size = 0x12000, scoped, tag = 'internal scratch']
  %s0 = inlined_call_operand.vmem [shape: f32[2,16,18,4], index: 0, kind: input, shape index: {}]
  %s1 = inlined_call_operand.vmem [shape: f32[2,16,18,4], index: 1, kind: input, shape index: {}]
  %s2 = inlined_call_operand.vmem [shape: f32[2,16,18,4], index: 2, kind: input, shape index: {}]
  %s3 = inlined_call_operand.vmem [shape: f32[9,4,32], index: 3, kind: input, shape index: {}]
  %s4 = inlined_call_operand.vmem [shape: f32[1,32], index: 4, kind: input, shape index: {}]
  %s5 = inlined_call_operand.vmem [shape: f32[2,256,32], index: 5, kind: output, shape index: {}]
  %s6 = sld [smem:[#allocation0]]
  $region53: #{input_proj.1} parent=0
    _
  %s8 = ssub.s32 1, %s6
  %s9 = scalar_select 0, %s8, %s6
  loop: start=0, step=1, limit=10
  $region2: #{input_proj.1} parent=0 // loop_pre_header
    _
  $region3: #{input_proj.1} parent=0 // loop_header
    %s11 = sphi 0, %s15
    %p12 = scmp.ge.s32.totalorder %s11, 10
    %s18 = sphi 0, %s30
    %s19 = sphi 0, %s26
    %s20 = sphi 0, %s18
    %s21 = sphi 0, %s19
    %s22 = sphi 0, %s20
    %s23 = sphi 0, %s21
    %s35 = sphi 0, %s37
    %s38 = sphi 0, %s35
    %s39 = sphi 0, %s38
    %s55 = sphi 0, %s39
    %s63 = sphi 0, %s65
    %s66 = sphi 0, %s63
    %s67 = sphi 0, %s66
    %s83 = sphi 0, %s67
    %s91 = sphi 0, %s93
    %s94 = sphi 0, %s91
    %s95 = sphi 0, %s94
    %s111 = sphi 0, %s95
    %s115 = sphi 0, %s115
    %s117 = sphi 0, %s115
    %s118 = sphi 0, %s117
    %s132 = sphi 0, %s118
    %s136 = sphi 0, %s136
    %s138 = sphi 0, %s136
    %s139 = sphi 0, %s138
    %s153 = sphi 0, %s139
    %s161 = sphi 0, %s163
    %s164 = sphi 0, %s161
    %s165 = sphi 0, %s164
    %s181 = sphi 0, %s165
  $region4: #{input_proj.1} parent=0 // loop_header_branch
    %14 = sbr.rel (%p12) target = $region8
  $region5: #{input_proj.1} parent=0 // loop_body
    %s16 = ssub.s32 %s11, 1
    %s17 = ssub.s32 %s11, 2
    %s24 = sadd.s32 1, %s19
    %p25 = scmp.ge.s32.totalorder %s24, 4
    %s26 = scalar_select %p25, 0, %s24
    %s27 = sadd.s32 1, %s18
    %s28 = scalar_select %p25, %s27, %s18
    %p29 = scmp.ge.s32.totalorder %s28, 2
    %s30 = scalar_select %p29, 0, %s28
    %s31 = ssub.s32 %s18, %s30
    %s32 = ssub.s32 %s19, %s26
    %s33 = sor.u32 %s31, %s32
    %p34 = scmp.eq.s32.totalorder %s33, 0
    %s36 = sadd.s32 %s35, 1
    %s37 = scalar_select %p34, %s35, %s36
    %p40 = pneg %p34
    %p41 = scmp.eq.s32.totalorder %s11, 7
    %p42 = por %p40, %p41
    %p43 = scmp.ne.s32.totalorder %s35, %s38
    %p44 = scmp.eq.s32.totalorder %s11, 0
    %p45 = por %p43, %p44
    %p46 = scmp.ne.s32.totalorder %s35, %s38
    %p47 = scmp.eq.s32.totalorder %s16, 7
    %p48 = por %p46, %p47
    %p49 = scmp.ne.s32.totalorder %s38, %s39
    %p50 = scmp.eq.s32.totalorder %s16, 0
    %p51 = por %p49, %p50
    %p52 = scmp.ne.s32.totalorder %s38, %s39
    %p53 = scmp.eq.s32.totalorder %s17, 7
    %p54 = por %p52, %p53
    %p56 = scmp.ne.s32.totalorder %s39, %s55
    %p57 = scmp.eq.s32.totalorder %s17, 0
    %p58 = por %p56, %p57
    %s59 = ssub.s32 %s18, %s30
    %s60 = ssub.s32 %s19, %s26
    %s61 = sor.u32 %s59, %s60
    %p62 = scmp.eq.s32.totalorder %s61, 0
    %s64 = sadd.s32 %s63, 1
    %s65 = scalar_select %p62, %s63, %s64
    %p68 = pneg %p62
    %p69 = scmp.eq.s32.totalorder %s11, 7
    %p70 = por %p68, %p69
    %p71 = scmp.ne.s32.totalorder %s63, %s66
    %p72 = scmp.eq.s32.totalorder %s11, 0
    %p73 = por %p71, %p72
    %p74 = scmp.ne.s32.totalorder %s63, %s66
    %p75 = scmp.eq.s32.totalorder %s16, 7
    %p76 = por %p74, %p75
    %p77 = scmp.ne.s32.totalorder %s66, %s67
    %p78 = scmp.eq.s32.totalorder %s16, 0
    %p79 = por %p77, %p78
    %p80 = scmp.ne.s32.totalorder %s66, %s67
    %p81 = scmp.eq.s32.totalorder %s17, 7
    %p82 = por %p80, %p81
    %p84 = scmp.ne.s32.totalorder %s67, %s83
    %p85 = scmp.eq.s32.totalorder %s17, 0
    %p86 = por %p84, %p85
    %s87 = ssub.s32 %s18, %s30
    %s88 = ssub.s32 %s19, %s26
    %s89 = sor.u32 %s87, %s88
    %p90 = scmp.eq.s32.totalorder %s89, 0
    %s92 = sadd.s32 %s91, 1
    %s93 = scalar_select %p90, %s91, %s92
    %p96 = pneg %p90
    %p97 = scmp.eq.s32.totalorder %s11, 7
    %p98 = por %p96, %p97
    %p99 = scmp.ne.s32.totalorder %s91, %s94
    %p100 = scmp.eq.s32.totalorder %s11, 0
    %p101 = por %p99, %p100
    %p102 = scmp.ne.s32.totalorder %s91, %s94
    %p103 = scmp.eq.s32.totalorder %s16, 7
    %p104 = por %p102, %p103
    %p105 = scmp.ne.s32.totalorder %s94, %s95
    %p106 = scmp.eq.s32.totalorder %s16, 0
    %p107 = por %p105, %p106
    %p108 = scmp.ne.s32.totalorder %s94, %s95
    %p109 = scmp.eq.s32.totalorder %s17, 7
    %p110 = por %p108, %p109
    %p112 = scmp.ne.s32.totalorder %s95, %s111
    %p113 = scmp.eq.s32.totalorder %s17, 0
    %p114 = por %p112, %p113
    %s116 = sadd.s32 %s115, 1
    %p119 = scmp.eq.s32.totalorder %s11, 7
    %p120 = scmp.ne.s32.totalorder %s115, %s117
    %p121 = scmp.eq.s32.totalorder %s11, 0
    %p122 = por %p120, %p121
    %p123 = scmp.ne.s32.totalorder %s115, %s117
    %p124 = scmp.eq.s32.totalorder %s16, 7
    %p125 = por %p123, %p124
    %p126 = scmp.ne.s32.totalorder %s117, %s118
    %p127 = scmp.eq.s32.totalorder %s16, 0
    %p128 = por %p126, %p127
    %p129 = scmp.ne.s32.totalorder %s117, %s118
    %p130 = scmp.eq.s32.totalorder %s17, 7
    %p131 = por %p129, %p130
    %p133 = scmp.ne.s32.totalorder %s118, %s132
    %p134 = scmp.eq.s32.totalorder %s17, 0
    %p135 = por %p133, %p134
    %s137 = sadd.s32 %s136, 1
    %p140 = scmp.eq.s32.totalorder %s11, 7
    %p141 = scmp.ne.s32.totalorder %s136, %s138
    %p142 = scmp.eq.s32.totalorder %s11, 0
    %p143 = por %p141, %p142
    %p144 = scmp.ne.s32.totalorder %s136, %s138
    %p145 = scmp.eq.s32.totalorder %s16, 7
    %p146 = por %p144, %p145
    %p147 = scmp.ne.s32.totalorder %s138, %s139
    %p148 = scmp.eq.s32.totalorder %s16, 0
    %p149 = por %p147, %p148
    %p150 = scmp.ne.s32.totalorder %s138, %s139
    %p151 = scmp.eq.s32.totalorder %s17, 7
    %p152 = por %p150, %p151
    %p154 = scmp.ne.s32.totalorder %s139, %s153
    %p155 = scmp.eq.s32.totalorder %s17, 0
    %p156 = por %p154, %p155
    %s157 = ssub.s32 %s18, %s30
    %s158 = ssub.s32 %s19, %s26
    %s159 = sor.u32 %s157, %s158
    %p160 = scmp.eq.s32.totalorder %s159, 0
    %s162 = sadd.s32 %s161, 1
    %s163 = scalar_select %p160, %s161, %s162
    %p166 = pneg %p160
    %p167 = scmp.eq.s32.totalorder %s11, 7
    %p168 = por %p166, %p167
    %p169 = scmp.ne.s32.totalorder %s161, %s164
    %p170 = scmp.eq.s32.totalorder %s11, 0
    %p171 = por %p169, %p170
    %p172 = scmp.ne.s32.totalorder %s161, %s164
    %p173 = scmp.eq.s32.totalorder %s16, 7
    %p174 = por %p172, %p173
    %p175 = scmp.ne.s32.totalorder %s164, %s165
    %p176 = scmp.eq.s32.totalorder %s16, 0
    %p177 = por %p175, %p176
    %p178 = scmp.ne.s32.totalorder %s164, %s165
    %p179 = scmp.eq.s32.totalorder %s17, 7
    %p180 = por %p178, %p179
    %p182 = scmp.ne.s32.totalorder %s165, %s181
    %p183 = scmp.eq.s32.totalorder %s17, 0
    %p184 = por %p182, %p183
    %p185 = scmp.le.s32.totalorder 1, %s11
    %p186 = scmp.lt.s32.totalorder %s11, 9
    %p187 = pnand %p185, %p186
    %p188 = pneg %p187
    // Predicated region
    $region9: #{input_proj.1} parent=5 // pred_check
      _
    $region10: #{input_proj.1} parent=5 // pred_check_branch
      %190 = sbr.rel (%p187) target = $region12
    $region11: #{input_proj.1} parent=5 // pred_region
      %s191 = ssub.s32 %s11, 1
      // Predicated region
      $region13: #{input_proj.1} parent=11 // pred_check
        %p192 = pneg %p128
      $region14: #{input_proj.1} parent=11 // pred_check_branch
        %194 = sbr.rel (%p192) target = $region16
      $region15: #{input_proj.1} parent=11 // pred_region
        _
      $region16: #{input_proj.1} parent=11 // pred_fallthru
        _
      // Predicated region
      $region17: #{input_proj.1} parent=11 // pred_check
        %p195 = pneg %p149
      $region18: #{input_proj.1} parent=11 // pred_check_branch
        %197 = sbr.rel (%p195) target = $region20
      $region19: #{input_proj.1} parent=11 // pred_region
        _
      $region20: #{input_proj.1} parent=11 // pred_fallthru
        _
    $region12: #{input_proj.1} parent=5 // pred_fallthru
      _
    %p198 = scmp.lt.s32.totalorder %s11, 8
    // Predicated region
    $region21: #{input_proj.1} parent=5 // pred_check
      %p199 = pneg %p198
    $region22: #{input_proj.1} parent=5 // pred_check_branch
      %201 = sbr.rel (%p199) target = $region24
    $region23: #{input_proj.1} parent=5 // pred_region
      // Predicated region
      $region25: #{input_proj.1} parent=23 // pred_check
        %p202 = pneg %p45
      $region26: #{input_proj.1} parent=23 // pred_check_branch
        %204 = sbr.rel (%p202) target = $region28
      $region27: #{input_proj.1} parent=23 // pred_region
        %s205 = smul.u32 4, %s19
        %p206 = scmp.lt.s32.totalorder %s18, 1
        %s207 = scalar_select %p206, %s18, 1
        %p208 = scmp.lt.s32.totalorder %s205, 15
        %s209 = scalar_select %p208, %s205, 15
        %s210 = smul.addr %s209, 3
        %s211 = smul.addr %s207, 48
        %s212 = sadd.s32 %s210, %s211
        %s213 = smul.addr %s212, 8
        %s214 = scalar_lea.vmem %s0, %s213
        %s215 = smul.u32 4, %s19
      $region28: #{input_proj.1} parent=23 // pred_fallthru
        _
      // Predicated region
      $region29: #{input_proj.1} parent=23 // pred_check
        %p216 = pneg %p73
      $region30: #{input_proj.1} parent=23 // pred_check_branch
        %218 = sbr.rel (%p216) target = $region32
      $region31: #{input_proj.1} parent=23 // pred_region
        %s219 = smul.u32 4, %s19
        %p220 = scmp.lt.s32.totalorder %s18, 1
        %s221 = scalar_select %p220, %s18, 1
        %p222 = scmp.lt.s32.totalorder %s219, 15
        %s223 = scalar_select %p222, %s219, 15
        %s224 = smul.addr %s223, 3
        %s225 = smul.addr %s221, 48
        %s226 = sadd.s32 %s224, %s225
        %s227 = smul.addr %s226, 8
        %s228 = scalar_lea.vmem %s1, %s227
        %s229 = smul.u32 4, %s19
      $region32: #{input_proj.1} parent=23 // pred_fallthru
        _
      // Predicated region
      $region33: #{input_proj.1} parent=23 // pred_check
        %p230 = pneg %p101
      $region34: #{input_proj.1} parent=23 // pred_check_branch
        %232 = sbr.rel (%p230) target = $region36
      $region35: #{input_proj.1} parent=23 // pred_region
        %s233 = smul.u32 4, %s19
        %p234 = scmp.lt.s32.totalorder %s18, 1
        %s235 = scalar_select %p234, %s18, 1
        %p236 = scmp.lt.s32.totalorder %s233, 15
        %s237 = scalar_select %p236, %s233, 15
        %s238 = smul.addr %s237, 3
        %s239 = smul.addr %s235, 48
        %s240 = sadd.s32 %s238, %s239
        %s241 = smul.addr %s240, 8
        %s242 = scalar_lea.vmem %s2, %s241
        %s243 = smul.u32 4, %s19
      $region36: #{input_proj.1} parent=23 // pred_fallthru
        _
    $region24: #{input_proj.1} parent=5 // pred_fallthru
      _
    %p244 = scmp.le.s32.totalorder 1, %s11
    %p245 = scmp.lt.s32.totalorder %s11, 9
    %p246 = pnand %p244, %p245
    %p247 = pneg %p246
    // Predicated region
    $region37: #{input_proj.1} parent=5 // pred_check
      _
    $region38: #{input_proj.1} parent=5 // pred_check_branch
      %249 = sbr.rel (%p246) target = $region40
    $region39: #{input_proj.1} parent=5 // pred_region
      %s250 = ssub.s32 %s11, 1
      %s251 = smul.u32 4, %s21
      %p252 = scmp.lt.s32.totalorder %s20, 1
      %s253 = scalar_select %p252, %s20, 1
      %p254 = scmp.lt.s32.totalorder %s251, 15
      %s255 = scalar_select %p254, %s251, 15
      %s256 = smul.addr %s255, 3
      %s257 = smul.addr %s253, 48
      %s258 = sadd.s32 %s256, %s257
      %s259 = smul.addr %s258, 8
      %s260 = scalar_lea.vmem %s0, %s259
      %p261 = pneg %p51
      %p262 = pneg %p48
      %s263 = smul.u32 4, %s21
      %p264 = scmp.lt.s32.totalorder %s20, 1
      %s265 = scalar_select %p264, %s20, 1
      %p266 = scmp.lt.s32.totalorder %s263, 15
      %s267 = scalar_select %p266, %s263, 15
      %s268 = smul.addr %s267, 3
      %s269 = smul.addr %s265, 48
      %s270 = sadd.s32 %s268, %s269
      %s271 = smul.addr %s270, 8
      %s272 = scalar_lea.vmem %s1, %s271
      %p273 = pneg %p79
      %p274 = pneg %p76
      %s275 = smul.u32 4, %s21
      %p276 = scmp.lt.s32.totalorder %s20, 1
      %s277 = scalar_select %p276, %s20, 1
      %p278 = scmp.lt.s32.totalorder %s275, 15
      %s279 = scalar_select %p278, %s275, 15
      %s280 = smul.addr %s279, 3
      %s281 = smul.addr %s277, 48
      %s282 = sadd.s32 %s280, %s281
      %s283 = smul.addr %s282, 8
      %s284 = scalar_lea.vmem %s2, %s283
      %p285 = pneg %p107
      %p286 = pneg %p104
      %p287 = pneg %p128
      %p288 = pneg %p125
      %p289 = pneg %p149
      %p290 = pneg %p146
      %p291 = pneg %p177
      %p292 = pneg %p174
      %s293 = smul.u32 8, %s21
      %p294 = scmp.lt.s32.totalorder %s20, 1
      %s295 = scalar_select %p294, %s20, 1
      %p296 = scmp.lt.s32.totalorder %s293, 31
      %s297 = scalar_select %p296, %s293, 31
      %s298 = smul.addr %s295, 32
      %s299 = sadd.s32 %s297, %s298
      %s300 = smul.addr %s299, 8
      %s301 = scalar_lea.vmem %s5, %s300
      %s302 = smul.u32 4, %s21
      %p303 = scmp.lt.s32.totalorder %s20, 1
      %s304 = scalar_select %p303, %s20, 1
      %p305 = scmp.lt.s32.totalorder %s302, 15
      %s306 = scalar_select %p305, %s302, 15
      %s307 = smul.addr %s306, 3
      %s308 = smul.addr %s304, 48
      %s309 = sadd.s32 %s307, %s308
      %s310 = smul.addr %s309, 8
      %s311 = scalar_lea.vmem %s0, %s310
      %s312 = smul.u32 4, %s21
      %s313 = smul.u32 4, %s21
      %p314 = scmp.lt.s32.totalorder %s20, 1
      %s315 = scalar_select %p314, %s20, 1
      %p316 = scmp.lt.s32.totalorder %s313, 15
      %s317 = scalar_select %p316, %s313, 15
      %s318 = smul.addr %s317, 3
      %s319 = smul.addr %s315, 48
      %s320 = sadd.s32 %s318, %s319
      %s321 = smul.addr %s320, 8
      %s322 = scalar_lea.vmem %s1, %s321
      %s323 = smul.u32 4, %s21
      %s324 = smul.u32 4, %s21
      %p325 = scmp.lt.s32.totalorder %s20, 1
      %s326 = scalar_select %p325, %s20, 1
      %p327 = scmp.lt.s32.totalorder %s324, 15
      %s328 = scalar_select %p327, %s324, 15
      %s329 = smul.addr %s328, 3
      %s330 = smul.addr %s326, 48
      %s331 = sadd.s32 %s329, %s330
      %s332 = smul.addr %s331, 8
      %s333 = scalar_lea.vmem %s2, %s332
      %s334 = smul.u32 4, %s21
      %s335 = smul.u32 8, %s21
      %p336 = scmp.lt.s32.totalorder %s20, 1
      %s337 = scalar_select %p336, %s20, 1
      %p338 = scmp.lt.s32.totalorder %s335, 31
      %s339 = scalar_select %p338, %s335, 31
      %s340 = smul.addr %s337, 32
      %s341 = sadd.s32 %s339, %s340
      %s342 = smul.addr %s341, 8
      %s343 = scalar_lea.vmem %s5, %s342
      %s344 = smul.u32 8, %s21
      %v345 = vld [vmem:[%s311] sm:$0xff]
      %v346 = vld [vmem:[%s311 + $0x8] sm:$0xff]
      %v347 = vld [vmem:[%s311 + $0x18] sm:$0xff]
      %v348 = vld [vmem:[%s311 + $0x20] sm:$0xff]
      %v349 = vld [vmem:[%s311 + $0x30] sm:$0xff]
      %v350 = vld [vmem:[%s311 + $0x38] sm:$0xff]
      %v351 = vld [vmem:[%s311 + $0x48] sm:$0xff]
      %v352 = vld [vmem:[%s311 + $0x50] sm:$0xff]
      %v353 = vld [vmem:[%s3] sm:$0xf]
      %v354 = vld [vmem:[%s311 + $0x1] sm:$0xff]
      %v355 = vld [vmem:[%s311 + $0x9] sm:$0xff]
      %v356 = vld [vmem:[%s311 + $0x19] sm:$0xff]
      %v357 = vld [vmem:[%s311 + $0x21] sm:$0xff]
      %v358 = vld [vmem:[%s311 + $0x31] sm:$0xff]
      %v359 = vld [vmem:[%s311 + $0x39] sm:$0xff]
      %v360 = vld [vmem:[%s311 + $0x49] sm:$0xff]
      %v361 = vld [vmem:[%s311 + $0x51] sm:$0xff]
      %s362 = scalar_lea.vmem %s3, 4
      %v363 = vld [vmem:[%s362] sm:$0xf]
      %vm364 = vcmask 31744
      %v366 = vsel %vm364, %v354, 0
      %v369 = vsel %vm364, %v355, 0
      %v372 = vsel %vm364, %v356, 0
      %v375 = vsel %vm364, %v357, 0
      %v378 = vsel %vm364, %v358, 0
      %v381 = vsel %vm364, %v359, 0
      %v384 = vsel %vm364, %v360, 0
      %v387 = vsel %vm364, %v361, 0
      %vm389 = vcmask 1043456
      %v391 = vsel %vm389, %v363, 0
      %393 = vmatprep.subr.mxu0 0.0
      %394 = vmatpush1.msra.mxu0 %v391
      %395 = vmatprep.subr.mxu0 0.0
      %396 = vmatpush1.msra.mxu0 0.0
      %397 = vmatprep.subr.mxu0 0.0
      %398 = vmatpush1.msra.mxu0 0.0
      %399 = vmatprep.subr.mxu0 0.0
      %400 = vmatpush1.msra.mxu0 0.0
      %401 = vmatprep.subr.mxu0 0.0
      %402 = vmatpush1.msra.mxu0 0.0
      %403 = vmatprep.subr.mxu0 0.0
      %404 = vmatpush1.msra.mxu0 0.0
      %405 = vmatprep.subr.mxu0 0.0
      %406 = vmatpush1.msra.mxu0 0.0
      %407 = vmatprep.subr.mxu0 0.0
      %408 = vmatpush1.msra.mxu0 0.0
      %409 = vmatprep.subr.mxu0 0.0
      %410 = vmatpush1.msra.mxu0 0.0
      %411 = vmatprep.subr.mxu0 0.0
      %412 = vmatpush1.msra.mxu0 0.0
      %413 = vmatprep.subr.mxu0 0.0
      %414 = vmatpush1.msra.mxu0 0.0
      %415 = vmatprep.subr.mxu0 0.0
      %416 = vmatpush1.msra.mxu0 0.0
      %417 = vmatprep.subr.mxu0 0.0
      %418 = vmatpush1.msra.mxu0 0.0
      %419 = vmatprep.subr.mxu0 0.0
      %420 = vmatpush1.msra.mxu0 0.0
      %421 = vmatprep.subr.mxu0 0.0
      %422 = vmatpush1.msra.mxu0 0.0
      %423 = vmatprep.subr.mxu0 0.0
      %424 = vmatpush1.msra.mxu0 0.0
      %425 = vmatprep.subr.mxu0 0.0
      %426 = vmatpush1.msra.mxu0 0.0
      %427 = vmatprep.subr.mxu0 0.0
      %428 = vmatpush1.msra.mxu0 0.0
      %429 = vmatprep.subr.mxu0 0.0
      %430 = vmatpush1.msra.mxu0 0.0
      %431 = vmatprep.subr.mxu0 0.0
      %432 = vmatpush1.msra.mxu0 0.0
      %433 = vmatprep.subr.mxu0 0.0
      %434 = vmatpush1.msra.mxu0 0.0
      %435 = vmatprep.subr.mxu0 0.0
      %436 = vmatpush1.msra.mxu0 0.0
      %437 = vmatprep.subr.mxu0 0.0
      %438 = vmatpush1.msra.mxu0 0.0
      %439 = vmatprep.subr.mxu0 0.0
      %440 = vmatpush1.msra.mxu0 0.0
      %441 = vmatprep.subr.mxu0 0.0
      %442 = vmatpush1.msra.mxu0 0.0
      %443 = vmatprep.subr.mxu0 0.0
      %444 = vmatpush1.msra.mxu0 0.0
      %445 = vmatprep.subr.mxu0 0.0
      %446 = vmatpush1.msra.mxu0 0.0
      %447 = vmatprep.subr.mxu0 0.0
      %448 = vmatpush1.msra.mxu0 0.0
      %449 = vmatprep.subr.mxu0 0.0
      %450 = vmatpush1.msra.mxu0 0.0
      %451 = vmatprep.subr.mxu0 0.0
      %452 = vmatpush1.msra.mxu0 0.0
      %453 = vmatprep.subr.mxu0 0.0
      %454 = vmatpush1.msra.mxu0 0.0
      %455 = vmatprep.subr.mxu0 0.0
      %456 = vmatpush1.msra.mxu0 0.0
      %457 = vmatprep.mubr.f32.mxu0 0.0
      %458 = vmatmul.mubr.f32.gmra.mrb[0].mxu0 %v366
      %v459 = vpop.f32.mrb[0].mxu0
      %v460 = vadd.f32 0.0, %v459
      %v461 = vpop.f32.mrb[0].mxu0
      %462 = vmatprep.mubr.f32.mxu0 0.0
      %463 = vmatmul.mubr.f32.gmra.mrb[0].mxu0 %v369
      %v464 = vpop.f32.mrb[0].mxu0
      %v465 = vadd.f32 0.0, %v464
      %v466 = vpop.f32.mrb[0].mxu0
      %467 = vmatprep.mubr.f32.mxu0 0.0
      %468 = vmatmul.mubr.f32.gmra.mrb[0].mxu0 %v372
      %v469 = vpop.f32.mrb[0].mxu0
      %v470 = vadd.f32 0.0, %v469
      %v471 = vpop.f32.mrb[0].mxu0
      %472 = vmatprep.mubr.f32.mxu0 0.0
      %473 = vmatmul.mubr.f32.gmra.mrb[0].mxu0 %v375
      %v474 = vpop.f32.mrb[0].mxu0
      %v475 = vadd.f32 0.0, %v474
      %v476 = vpop.f32.mrb[0].mxu0
      %477 = vmatprep.mubr.f32.mxu0 0.0
      %478 = vmatmul.mubr.f32.gmra.mrb[0].mxu0 %v378
      %v479 = vpop.f32.mrb[0].mxu0
      %v480 = vadd.f32 0.0, %v479
      %v481 = vpop.f32.mrb[0].mxu0
      %482 = vmatprep.mubr.f32.mxu0 0.0
      %483 = vmatmul.mubr.f32.gmra.mrb[0].mxu0 %v381
      %v484 = vpop.f32.mrb[0].mxu0
      %v485 = vadd.f32 0.0, %v484
      %v486 = vpop.f32.mrb[0].mxu0
      %487 = vmatprep.mubr.f32.mxu0 0.0
      %488 = vmatmul.mubr.f32.gmra.mrb[0].mxu0 %v384
      %v489 = vpop.f32.mrb[0].mxu0
      %v490 = vadd.f32 0.0, %v489
      %v491 = vpop.f32.mrb[0].mxu0
      %492 = vmatprep.mubr.f32.mxu0 0.0
      %493 = vmatmul.mubr.f32.gmra.mrb[0].mxu0 %v387
      %v494 = vpop.f32.mrb[0].mxu0
      %v495 = vadd.f32 0.0, %v494
      %v496 = vpop.f32.mrb[0].mxu0
      %497 = vdwg.mxu0
      %v499 = vsel %vm364, %v345, 0
      %v502 = vsel %vm364, %v346, 0
      %v505 = vsel %vm364, %v347, 0
      %v508 = vsel %vm364, %v348, 0
      %v511 = vsel %vm364, %v349, 0
      %v514 = vsel %vm364, %v350, 0
      %v517 = vsel %vm364, %v351, 0
      %v520 = vsel %vm364, %v352, 0
      %v523 = vsel %vm389, %v353, 0
      %525 = vmatprep.subr.mxu0 0.0
      %526 = vmatpush1.msra.mxu0 %v523
      %527 = vmatprep.subr.mxu0 0.0
      %528 = vmatpush1.msra.mxu0 0.0
      %529 = vmatprep.subr.mxu0 0.0
      %530 = vmatpush1.msra.mxu0 0.0
      %531 = vmatprep.subr.mxu0 0.0
      %532 = vmatpush1.msra.mxu0 0.0
      %533 = vmatprep.subr.mxu0 0.0
      %534 = vmatpush1.msra.mxu0 0.0
      %535 = vmatprep.subr.mxu0 0.0
      %536 = vmatpush1.msra.mxu0 0.0
      %537 = vmatprep.subr.mxu0 0.0
      %538 = vmatpush1.msra.mxu0 0.0
      %539 = vmatprep.subr.mxu0 0.0
      %540 = vmatpush1.msra.mxu0 0.0
      %541 = vmatprep.subr.mxu0 0.0
      %542 = vmatpush1.msra.mxu0 0.0
      %543 = vmatprep.subr.mxu0 0.0
      %544 = vmatpush1.msra.mxu0 0.0
      %545 = vmatprep.subr.mxu0 0.0
      %546 = vmatpush1.msra.mxu0 0.0
      %547 = vmatprep.subr.mxu0 0.0
      %548 = vmatpush1.msra.mxu0 0.0
      %549 = vmatprep.subr.mxu0 0.0
      %550 = vmatpush1.msra.mxu0 0.0
      %551 = vmatprep.subr.mxu0 0.0
      %552 = vmatpush1.msra.mxu0 0.0
      %553 = vmatprep.subr.mxu0 0.0
      %554 = vmatpush1.msra.mxu0 0.0
      %555 = vmatprep.subr.mxu0 0.0
      %556 = vmatpush1.msra.mxu0 0.0
      %557 = vmatprep.subr.mxu0 0.0
      %558 = vmatpush1.msra.mxu0 0.0
      %559 = vmatprep.subr.mxu0 0.0
      %560 = vmatpush1.msra.mxu0 0.0
      %561 = vmatprep.subr.mxu0 0.0
      %562 = vmatpush1.msra.mxu0 0.0
      %563 = vmatprep.subr.mxu0 0.0
      %564 = vmatpush1.msra.mxu0 0.0
      %565 = vmatprep.subr.mxu0 0.0
      %566 = vmatpush1.msra.mxu0 0.0
      %567 = vmatprep.subr.mxu0 0.0
      %568 = vmatpush1.msra.mxu0 0.0
      %569 = vmatprep.subr.mxu0 0.0
      %570 = vmatpush1.msra.mxu0 0.0
      %571 = vmatprep.subr.mxu0 0.0
      %572 = vmatpush1.msra.mxu0 0.0
      %573 = vmatprep.subr.mxu0 0.0
      %574 = vmatpush1.msra.mxu0 0.0
      %575 = vmatprep.subr.mxu0 0.0
      %576 = vmatpush1.msra.mxu0 0.0
      %577 = vmatprep.subr.mxu0 0.0
      %578 = vmatpush1.msra.mxu0 0.0
      %579 = vmatprep.subr.mxu0 0.0
      %580 = vmatpush1.msra.mxu0 0.0
      %581 = vmatprep.subr.mxu0 0.0
      %582 = vmatpush1.msra.mxu0 0.0
      %583 = vmatprep.subr.mxu0 0.0
      %584 = vmatpush1.msra.mxu0 0.0
      %585 = vmatprep.subr.mxu0 0.0
      %586 = vmatpush1.msra.mxu0 0.0
      %587 = vmatprep.subr.mxu0 0.0
      %588 = vmatpush1.msra.mxu0 0.0
      %589 = vmatprep.mubr.f32.mxu0 0.0
      %590 = vmatmul.mubr.f32.gmra.mrb[0].mxu0 %v499
      %v591 = vpop.f32.mrb[0].mxu0
      %v592 = vadd.f32 %v460, %v591
      %v593 = vpop.f32.mrb[0].mxu0
      %594 = vmatprep.mubr.f32.mxu0 0.0
      %595 = vmatmul.mubr.f32.gmra.mrb[0].mxu0 %v502
      %v596 = vpop.f32.mrb[0].mxu0
      %v597 = vadd.f32 %v465, %v596
      %v598 = vpop.f32.mrb[0].mxu0
      %599 = vmatprep.mubr.f32.mxu0 0.0
      %600 = vmatmul.mubr.f32.gmra.mrb[0].mxu0 %v505
      %v601 = vpop.f32.mrb[0].mxu0
      %v602 = vadd.f32 %v470, %v601
      %v603 = vpop.f32.mrb[0].mxu0
      %604 = vmatprep.mubr.f32.mxu0 0.0
      %605 = vmatmul.mubr.f32.gmra.mrb[0].mxu0 %v508
      %v606 = vpop.f32.mrb[0].mxu0
      %v607 = vadd.f32 %v475, %v606
      %v608 = vpop.f32.mrb[0].mxu0
      %609 = vmatprep.mubr.f32.mxu0 0.0
      %610 = vmatmul.mubr.f32.gmra.mrb[0].mxu0 %v511
      %v611 = vpop.f32.mrb[0].mxu0
      %v612 = vadd.f32 %v480, %v611
      %v613 = vpop.f32.mrb[0].mxu0
      %614 = vmatprep.mubr.f32.mxu0 0.0
      %615 = vmatmul.mubr.f32.gmra.mrb[0].mxu0 %v514
      %v616 = vpop.f32.mrb[0].mxu0
      %v617 = vadd.f32 %v485, %v616
      %v618 = vpop.f32.mrb[0].mxu0
      %619 = vmatprep.mubr.f32.mxu0 0.0
      %620 = vmatmul.mubr.f32.gmra.mrb[0].mxu0 %v517
      %v621 = vpop.f32.mrb[0].mxu0
      %v622 = vadd.f32 %v490, %v621
      %v623 = vpop.f32.mrb[0].mxu0
      %624 = vmatprep.mubr.f32.mxu0 0.0
      %625 = vmatmul.mubr.f32.gmra.mrb[0].mxu0 %v520
      %v626 = vpop.f32.mrb[0].mxu0
      %v627 = vadd.f32 %v495, %v626
      %v628 = vpop.f32.mrb[0].mxu0
      %629 = vdwg.mxu0
      %v630 = vld [vmem:[%s311 + $0x2] sm:$0xff]
      %v631 = vld [vmem:[%s311 + $0xa] sm:$0xff]
      %v632 = vld [vmem:[%s311 + $0x1a] sm:$0xff]
      %v633 = vld [vmem:[%s311 + $0x22] sm:$0xff]
      %v634 = vld [vmem:[%s311 + $0x32] sm:$0xff]
      %v635 = vld [vmem:[%s311 + $0x3a] sm:$0xff]
      %v636 = vld [vmem:[%s311 + $0x4a] sm:$0xff]
      %v637 = vld [vmem:[%s311 + $0x52] sm:$0xff]
      %s638 = scalar_lea.vmem %s3, 8
      %v639 = vld [vmem:[%s638] sm:$0xf]
      %v641 = vsel %vm364, %v630, 0
      %v644 = vsel %vm364, %v631, 0
      %v647 = vsel %vm364, %v632, 0
      %v650 = vsel %vm364, %v633, 0
      %v653 = vsel %vm364, %v634, 0
      %v656 = vsel %vm364, %v635, 0
      %v659 = vsel %vm364, %v636, 0
      %v662 = vsel %vm364, %v637, 0
      %v665 = vsel %vm389, %v639, 0
      %667 = vmatprep.subr.mxu0 0.0
      %668 = vmatpush1.msra.mxu0 %v665
      %669 = vmatprep.subr.mxu0 0.0
      %670 = vmatpush1.msra.mxu0 0.0
      %671 = vmatprep.subr.mxu0 0.0
      %672 = vmatpush1.msra.mxu0 0.0
      %673 = vmatprep.subr.mxu0 0.0
      %674 = vmatpush1.msra.mxu0 0.0
      %675 = vmatprep.subr.mxu0 0.0
      %676 = vmatpush1.msra.mxu0 0.0
      %677 = vmatprep.subr.mxu0 0.0
      %678 = vmatpush1.msra.mxu0 0.0
      %679 = vmatprep.subr.mxu0 0.0
      %680 = vmatpush1.msra.mxu0 0.0
      %681 = vmatprep.subr.mxu0 0.0
      %682 = vmatpush1.msra.mxu0 0.0
      %683 = vmatprep.subr.mxu0 0.0
      %684 = vmatpush1.msra.mxu0 0.0
      %685 = vmatprep.subr.mxu0 0.0
      %686 = vmatpush1.msra.mxu0 0.0
      %687 = vmatprep.subr.mxu0 0.0
      %688 = vmatpush1.msra.mxu0 0.0
      %689 = vmatprep.subr.mxu0 0.0
      %690 = vmatpush1.msra.mxu0 0.0
      %691 = vmatprep.subr.mxu0 0.0
      %692 = vmatpush1.msra.mxu0 0.0
      %693 = vmatprep.subr.mxu0 0.0
      %694 = vmatpush1.msra.mxu0 0.0
      %695 = vmatprep.subr.mxu0 0.0
      %696 = vmatpush1.msra.mxu0 0.0
      %697 = vmatprep.subr.mxu0 0.0
      %698 = vmatpush1.msra.mxu0 0.0
      %699 = vmatprep.subr.mxu0 0.0
      %700 = vmatpush1.msra.mxu0 0.0
      %701 = vmatprep.subr.mxu0 0.0
      %702 = vmatpush1.msra.mxu0 0.0
      %703 = vmatprep.subr.mxu0 0.0
      %704 = vmatpush1.msra.mxu0 0.0
      %705 = vmatprep.subr.mxu0 0.0
      %706 = vmatpush1.msra.mxu0 0.0
      %707 = vmatprep.subr.mxu0 0.0
      %708 = vmatpush1.msra.mxu0 0.0
      %709 = vmatprep.subr.mxu0 0.0
      %710 = vmatpush1.msra.mxu0 0.0
      %711 = vmatprep.subr.mxu0 0.0
      %712 = vmatpush1.msra.mxu0 0.0
      %713 = vmatprep.subr.mxu0 0.0
      %714 = vmatpush1.msra.mxu0 0.0
      %715 = vmatprep.subr.mxu0 0.0
      %716 = vmatpush1.msra.mxu0 0.0
      %717 = vmatprep.subr.mxu0 0.0
      %718 = vmatpush1.msra.mxu0 0.0
      %719 = vmatprep.subr.mxu0 0.0
      %720 = vmatpush1.msra.mxu0 0.0
      %721 = vmatprep.subr.mxu0 0.0
      %722 = vmatpush1.msra.mxu0 0.0
      %723 = vmatprep.subr.mxu0 0.0
      %724 = vmatpush1.msra.mxu0 0.0
      %725 = vmatprep.subr.mxu0 0.0
      %726 = vmatpush1.msra.mxu0 0.0
      %727 = vmatprep.subr.mxu0 0.0
      %728 = vmatpush1.msra.mxu0 0.0
      %729 = vmatprep.subr.mxu0 0.0
      %730 = vmatpush1.msra.mxu0 0.0
      %731 = vmatprep.mubr.f32.mxu0 0.0
      %732 = vmatmul.mubr.f32.gmra.mrb[0].mxu0 %v641
      %v733 = vpop.f32.mrb[0].mxu0
      %v734 = vadd.f32 0.0, %v733
      %v735 = vpop.f32.mrb[0].mxu0
      %736 = vmatprep.mubr.f32.mxu0 0.0
      %737 = vmatmul.mubr.f32.gmra.mrb[0].mxu0 %v644
      %v738 = vpop.f32.mrb[0].mxu0
      %v739 = vadd.f32 0.0, %v738
      %v740 = vpop.f32.mrb[0].mxu0
      %741 = vmatprep.mubr.f32.mxu0 0.0
      %742 = vmatmul.mubr.f32.gmra.mrb[0].mxu0 %v647
      %v743 = vpop.f32.mrb[0].mxu0
      %v744 = vadd.f32 0.0, %v743
      %v745 = vpop.f32.mrb[0].mxu0
      %746 = vmatprep.mubr.f32.mxu0 0.0
      %747 = vmatmul.mubr.f32.gmra.mrb[0].mxu0 %v650
      %v748 = vpop.f32.mrb[0].mxu0
      %v749 = vadd.f32 0.0, %v748
      %v750 = vpop.f32.mrb[0].mxu0
      %751 = vmatprep.mubr.f32.mxu0 0.0
      %752 = vmatmul.mubr.f32.gmra.mrb[0].mxu0 %v653
      %v753 = vpop.f32.mrb[0].mxu0
      %v754 = vadd.f32 0.0, %v753
      %v755 = vpop.f32.mrb[0].mxu0
      %756 = vmatprep.mubr.f32.mxu0 0.0
      %757 = vmatmul.mubr.f32.gmra.mrb[0].mxu0 %v656
      %v758 = vpop.f32.mrb[0].mxu0
      %v759 = vadd.f32 0.0, %v758
      %v760 = vpop.f32.mrb[0].mxu0
      %761 = vmatprep.mubr.f32.mxu0 0.0
      %762 = vmatmul.mubr.f32.gmra.mrb[0].mxu0 %v659
      %v763 = vpop.f32.mrb[0].mxu0
      %v764 = vadd.f32 0.0, %v763
      %v765 = vpop.f32.mrb[0].mxu0
      %766 = vmatprep.mubr.f32.mxu0 0.0
      %767 = vmatmul.mubr.f32.gmra.mrb[0].mxu0 %v662
      %v768 = vpop.f32.mrb[0].mxu0
      %v769 = vadd.f32 0.0, %v768
      %v770 = vpop.f32.mrb[0].mxu0
      %771 = vdwg.mxu0
      %v772 = vadd.f32 %v592, %v734
      %v773 = vadd.f32 %v597, %v739
      %v774 = vadd.f32 %v602, %v744
      %v775 = vadd.f32 %v607, %v749
      %v776 = vadd.f32 %v612, %v754
      %v777 = vadd.f32 %v617, %v759
      %v778 = vadd.f32 %v622, %v764
      %v779 = vadd.f32 %v627, %v769
      %v780 = vld [vmem:[%s322] sm:$0xff]
      %v781 = vld [vmem:[%s322 + $0x8] sm:$0xff]
      %v782 = vld [vmem:[%s322 + $0x18] sm:$0xff]
      %v783 = vld [vmem:[%s322 + $0x20] sm:$0xff]
      %v784 = vld [vmem:[%s322 + $0x30] sm:$0xff]
      %v785 = vld [vmem:[%s322 + $0x38] sm:$0xff]
      %v786 = vld [vmem:[%s322 + $0x48] sm:$0xff]
      %v787 = vld [vmem:[%s322 + $0x50] sm:$0xff]
      %s788 = scalar_lea.vmem %s3, 12
      %v789 = vld [vmem:[%s788] sm:$0xf]
      %v791 = vsel %vm364, %v780, 0
      %v794 = vsel %vm364, %v781, 0
      %v797 = vsel %vm364, %v782, 0
      %v800 = vsel %vm364, %v783, 0
      %v803 = vsel %vm364, %v784, 0
      %v806 = vsel %vm364, %v785, 0
      %v809 = vsel %vm364, %v786, 0
      %v812 = vsel %vm364, %v787, 0
      %v815 = vsel %vm389, %v789, 0
      %817 = vmatprep.subr.mxu0 0.0
      %818 = vmatpush1.msra.mxu0 %v815
      %819 = vmatprep.subr.mxu0 0.0
      %820 = vmatpush1.msra.mxu0 0.0
      %821 = vmatprep.subr.mxu0 0.0
      %822 = vmatpush1.msra.mxu0 0.0
      %823 = vmatprep.subr.mxu0 0.0
      %824 = vmatpush1.msra.mxu0 0.0
      %825 = vmatprep.subr.mxu0 0.0
      %826 = vmatpush1.msra.mxu0 0.0
      %827 = vmatprep.subr.mxu0 0.0
      %828 = vmatpush1.msra.mxu0 0.0
      %829 = vmatprep.subr.mxu0 0.0
      %830 = vmatpush1.msra.mxu0 0.0
      %831 = vmatprep.subr.mxu0 0.0
      %832 = vmatpush1.msra.mxu0 0.0
      %833 = vmatprep.subr.mxu0 0.0
      %834 = vmatpush1.msra.mxu0 0.0
      %835 = vmatprep.subr.mxu0 0.0
      %836 = vmatpush1.msra.mxu0 0.0
      %837 = vmatprep.subr.mxu0 0.0
      %838 = vmatpush1.msra.mxu0 0.0
      %839 = vmatprep.subr.mxu0 0.0
      %840 = vmatpush1.msra.mxu0 0.0
      %841 = vmatprep.subr.mxu0 0.0
      %842 = vmatpush1.msra.mxu0 0.0
      %843 = vmatprep.subr.mxu0 0.0
      %844 = vmatpush1.msra.mxu0 0.0
      %845 = vmatprep.subr.mxu0 0.0
      %846 = vmatpush1.msra.mxu0 0.0
      %847 = vmatprep.subr.mxu0 0.0
      %848 = vmatpush1.msra.mxu0 0.0
      %849 = vmatprep.subr.mxu0 0.0
      %850 = vmatpush1.msra.mxu0 0.0
      %851 = vmatprep.subr.mxu0 0.0
      %852 = vmatpush1.msra.mxu0 0.0
      %853 = vmatprep.subr.mxu0 0.0
      %854 = vmatpush1.msra.mxu0 0.0
      %855 = vmatprep.subr.mxu0 0.0
      %856 = vmatpush1.msra.mxu0 0.0
      %857 = vmatprep.subr.mxu0 0.0
      %858 = vmatpush1.msra.mxu0 0.0
      %859 = vmatprep.subr.mxu0 0.0
      %860 = vmatpush1.msra.mxu0 0.0
      %861 = vmatprep.subr.mxu0 0.0
      %862 = vmatpush1.msra.mxu0 0.0
      %863 = vmatprep.subr.mxu0 0.0
      %864 = vmatpush1.msra.mxu0 0.0
      %865 = vmatprep.subr.mxu0 0.0
      %866 = vmatpush1.msra.mxu0 0.0
      %867 = vmatprep.subr.mxu0 0.0
      %868 = vmatpush1.msra.mxu0 0.0
      %869 = vmatprep.subr.mxu0 0.0
      %870 = vmatpush1.msra.mxu0 0.0
      %871 = vmatprep.subr.mxu0 0.0
      %872 = vmatpush1.msra.mxu0 0.0
      %873 = vmatprep.subr.mxu0 0.0
      %874 = vmatpush1.msra.mxu0 0.0
      %875 = vmatprep.subr.mxu0 0.0
      %876 = vmatpush1.msra.mxu0 0.0
      %877 = vmatprep.subr.mxu0 0.0
      %878 = vmatpush1.msra.mxu0 0.0
      %879 = vmatprep.subr.mxu0 0.0
      %880 = vmatpush1.msra.mxu0 0.0
      %881 = vmatprep.mubr.f32.mxu0 0.0
      %882 = vmatmul.mubr.f32.gmra.mrb[0].mxu0 %v791
      %v883 = vpop.f32.mrb[0].mxu0
      %v884 = vadd.f32 0.0, %v883
      %v885 = vpop.f32.mrb[0].mxu0
      %886 = vmatprep.mubr.f32.mxu0 0.0
      %887 = vmatmul.mubr.f32.gmra.mrb[0].mxu0 %v794
      %v888 = vpop.f32.mrb[0].mxu0
      %v889 = vadd.f32 0.0, %v888
      %v890 = vpop.f32.mrb[0].mxu0
      %891 = vmatprep.mubr.f32.mxu0 0.0
      %892 = vmatmul.mubr.f32.gmra.mrb[0].mxu0 %v797
      %v893 = vpop.f32.mrb[0].mxu0
      %v894 = vadd.f32 0.0, %v893
      %v895 = vpop.f32.mrb[0].mxu0
      %896 = vmatprep.mubr.f32.mxu0 0.0
      %897 = vmatmul.mubr.f32.gmra.mrb[0].mxu0 %v800
      %v898 = vpop.f32.mrb[0].mxu0
      %v899 = vadd.f32 0.0, %v898
      %v900 = vpop.f32.mrb[0].mxu0
      %901 = vmatprep.mubr.f32.mxu0 0.0
      %902 = vmatmul.mubr.f32.gmra.mrb[0].mxu0 %v803
      %v903 = vpop.f32.mrb[0].mxu0
      %v904 = vadd.f32 0.0, %v903
      %v905 = vpop.f32.mrb[0].mxu0
      %906 = vmatprep.mubr.f32.mxu0 0.0
      %907 = vmatmul.mubr.f32.gmra.mrb[0].mxu0 %v806
      %v908 = vpop.f32.mrb[0].mxu0
      %v909 = vadd.f32 0.0, %v908
      %v910 = vpop.f32.mrb[0].mxu0
      %911 = vmatprep.mubr.f32.mxu0 0.0
      %912 = vmatmul.mubr.f32.gmra.mrb[0].mxu0 %v809
      %v913 = vpop.f32.mrb[0].mxu0
      %v914 = vadd.f32 0.0, %v913
      %v915 = vpop.f32.mrb[0].mxu0
      %916 = vmatprep.mubr.f32.mxu0 0.0
      %917 = vmatmul.mubr.f32.gmra.mrb[0].mxu0 %v812
      %v918 = vpop.f32.mrb[0].mxu0
      %v919 = vadd.f32 0.0, %v918
      %v920 = vpop.f32.mrb[0].mxu0
      %921 = vdwg.mxu0
      %v922 = vadd.f32 %v772, %v884
      %v923 = vadd.f32 %v773, %v889
      %v924 = vadd.f32 %v774, %v894
      %v925 = vadd.f32 %v775, %v899
      %v926 = vadd.f32 %v776, %v904
      %v927 = vadd.f32 %v777, %v909
      %v928 = vadd.f32 %v778, %v914
      %v929 = vadd.f32 %v779, %v919
      %v930 = vld [vmem:[%s322 + $0x1] sm:$0xff]
      %v931 = vld [vmem:[%s322 + $0x9] sm:$0xff]
      %v932 = vld [vmem:[%s322 + $0x19] sm:$0xff]
      %v933 = vld [vmem:[%s322 + $0x21] sm:$0xff]
      %v934 = vld [vmem:[%s322 + $0x31] sm:$0xff]
      %v935 = vld [vmem:[%s322 + $0x39] sm:$0xff]
      %v936 = vld [vmem:[%s322 + $0x49] sm:$0xff]
      %v937 = vld [vmem:[%s322 + $0x51] sm:$0xff]
      %s938 = scalar_lea.vmem %s3, 16
      %v939 = vld [vmem:[%s938] sm:$0xf]
      %v941 = vsel %vm364, %v930, 0
      %v944 = vsel %vm364, %v931, 0
      %v947 = vsel %vm364, %v932, 0
      %v950 = vsel %vm364, %v933, 0
      %v953 = vsel %vm364, %v934, 0
      %v956 = vsel %vm364, %v935, 0
      %v959 = vsel %vm364, %v936, 0
      %v962 = vsel %vm364, %v937, 0
      %v965 = vsel %vm389, %v939, 0
      %967 = vmatprep.subr.mxu0 0.0
      %968 = vmatpush1.msra.mxu0 %v965
      %969 = vmatprep.subr.mxu0 0.0
      %970 = vmatpush1.msra.mxu0 0.0
      %971 = vmatprep.subr.mxu0 0.0
      %972 = vmatpush1.msra.mxu0 0.0
      %973 = vmatprep.subr.mxu0 0.0
      %974 = vmatpush1.msra.mxu0 0.0
      %975 = vmatprep.subr.mxu0 0.0
      %976 = vmatpush1.msra.mxu0 0.0
      %977 = vmatprep.subr.mxu0 0.0
      %978 = vmatpush1.msra.mxu0 0.0
      %979 = vmatprep.subr.mxu0 0.0
      %980 = vmatpush1.msra.mxu0 0.0
      %981 = vmatprep.subr.mxu0 0.0
      %982 = vmatpush1.msra.mxu0 0.0
      %983 = vmatprep.subr.mxu0 0.0
      %984 = vmatpush1.msra.mxu0 0.0
      %985 = vmatprep.subr.mxu0 0.0
      %986 = vmatpush1.msra.mxu0 0.0
      %987 = vmatprep.subr.mxu0 0.0
      %988 = vmatpush1.msra.mxu0 0.0
      %989 = vmatprep.subr.mxu0 0.0
      %990 = vmatpush1.msra.mxu0 0.0
      %991 = vmatprep.subr.mxu0 0.0
      %992 = vmatpush1.msra.mxu0 0.0
      %993 = vmatprep.subr.mxu0 0.0
      %994 = vmatpush1.msra.mxu0 0.0
      %995 = vmatprep.subr.mxu0 0.0
      %996 = vmatpush1.msra.mxu0 0.0
      %997 = vmatprep.subr.mxu0 0.0
      %998 = vmatpush1.msra.mxu0 0.0
      %999 = vmatprep.subr.mxu0 0.0
      %1000 = vmatpush1.msra.mxu0 0.0
      %1001 = vmatprep.subr.mxu0 0.0
      %1002 = vmatpush1.msra.mxu0 0.0
      %1003 = vmatprep.subr.mxu0 0.0
      %1004 = vmatpush1.msra.mxu0 0.0
      %1005 = vmatprep.subr.mxu0 0.0
      %1006 = vmatpush1.msra.mxu0 0.0
      %1007 = vmatprep.subr.mxu0 0.0
      %1008 = vmatpush1.msra.mxu0 0.0
      %1009 = vmatprep.subr.mxu0 0.0
      %1010 = vmatpush1.msra.mxu0 0.0
      %1011 = vmatprep.subr.mxu0 0.0
      %1012 = vmatpush1.msra.mxu0 0.0
      %1013 = vmatprep.subr.mxu0 0.0
      %1014 = vmatpush1.msra.mxu0 0.0
      %1015 = vmatprep.subr.mxu0 0.0
      %1016 = vmatpush1.msra.mxu0 0.0
      %1017 = vmatprep.subr.mxu0 0.0
      %1018 = vmatpush1.msra.mxu0 0.0
      %1019 = vmatprep.subr.mxu0 0.0
      %1020 = vmatpush1.msra.mxu0 0.0
      %1021 = vmatprep.subr.mxu0 0.0
      %1022 = vmatpush1.msra.mxu0 0.0
      %1023 = vmatprep.subr.mxu0 0.0
      %1024 = vmatpush1.msra.mxu0 0.0
      %1025 = vmatprep.subr.mxu0 0.0
      %1026 = vmatpush1.msra.mxu0 0.0
      %1027 = vmatprep.subr.mxu0 0.0
      %1028 = vmatpush1.msra.mxu0 0.0
      %1029 = vmatprep.subr.mxu0 0.0
      %1030 = vmatpush1.msra.mxu0 0.0
      %1031 = vmatprep.mubr.f32.mxu0 0.0
      %1032 = vmatmul.mubr.f32.gmra.mrb[0].mxu0 %v941
      %v1033 = vpop.f32.mrb[0].mxu0
      %v1034 = vadd.f32 0.0, %v1033
      %v1035 = vpop.f32.mrb[0].mxu0
      %1036 = vmatprep.mubr.f32.mxu0 0.0
      %1037 = vmatmul.mubr.f32.gmra.mrb[0].mxu0 %v944
      %v1038 = vpop.f32.mrb[0].mxu0
      %v1039 = vadd.f32 0.0, %v1038
      %v1040 = vpop.f32.mrb[0].mxu0
      %1041 = vmatprep.mubr.f32.mxu0 0.0
      %1042 = vmatmul.mubr.f32.gmra.mrb[0].mxu0 %v947
      %v1043 = vpop.f32.mrb[0].mxu0
      %v1044 = vadd.f32 0.0, %v1043
      %v1045 = vpop.f32.mrb[0].mxu0
      %1046 = vmatprep.mubr.f32.mxu0 0.0
      %1047 = vmatmul.mubr.f32.gmra.mrb[0].mxu0 %v950
      %v1048 = vpop.f32.mrb[0].mxu0
      %v1049 = vadd.f32 0.0, %v1048
      %v1050 = vpop.f32.mrb[0].mxu0
      %1051 = vmatprep.mubr.f32.mxu0 0.0
      %1052 = vmatmul.mubr.f32.gmra.mrb[0].mxu0 %v953
      %v1053 = vpop.f32.mrb[0].mxu0
      %v1054 = vadd.f32 0.0, %v1053
      %v1055 = vpop.f32.mrb[0].mxu0
      %1056 = vmatprep.mubr.f32.mxu0 0.0
      %1057 = vmatmul.mubr.f32.gmra.mrb[0].mxu0 %v956
      %v1058 = vpop.f32.mrb[0].mxu0
      %v1059 = vadd.f32 0.0, %v1058
      %v1060 = vpop.f32.mrb[0].mxu0
      %1061 = vmatprep.mubr.f32.mxu0 0.0
      %1062 = vmatmul.mubr.f32.gmra.mrb[0].mxu0 %v959
      %v1063 = vpop.f32.mrb[0].mxu0
      %v1064 = vadd.f32 0.0, %v1063
      %v1065 = vpop.f32.mrb[0].mxu0
      %1066 = vmatprep.mubr.f32.mxu0 0.0
      %1067 = vmatmul.mubr.f32.gmra.mrb[0].mxu0 %v962
      %v1068 = vpop.f32.mrb[0].mxu0
      %v1069 = vadd.f32 0.0, %v1068
      %v1070 = vpop.f32.mrb[0].mxu0
      %1071 = vdwg.mxu0
      %v1072 = vadd.f32 %v922, %v1034
      %v1073 = vadd.f32 %v923, %v1039
      %v1074 = vadd.f32 %v924, %v1044
      %v1075 = vadd.f32 %v925, %v1049
      %v1076 = vadd.f32 %v926, %v1054
      %v1077 = vadd.f32 %v927, %v1059
      %v1078 = vadd.f32 %v928, %v1064
      %v1079 = vadd.f32 %v929, %v1069
      %v1080 = vld [vmem:[%s322 + $0x2] sm:$0xff]
      %v1081 = vld [vmem:[%s322 + $0xa] sm:$0xff]
      %v1082 = vld [vmem:[%s322 + $0x1a] sm:$0xff]
      %v1083 = vld [vmem:[%s322 + $0x22] sm:$0xff]
      %v1084 = vld [vmem:[%s322 + $0x32] sm:$0xff]
      %v1085 = vld [vmem:[%s322 + $0x3a] sm:$0xff]
      %v1086 = vld [vmem:[%s322 + $0x4a] sm:$0xff]
      %v1087 = vld [vmem:[%s322 + $0x52] sm:$0xff]
      %s1088 = scalar_lea.vmem %s3, 20
      %v1089 = vld [vmem:[%s1088] sm:$0xf]
      %v1091 = vsel %vm364, %v1080, 0
      %v1094 = vsel %vm364, %v1081, 0
      %v1097 = vsel %vm364, %v1082, 0
      %v1100 = vsel %vm364, %v1083, 0
      %v1103 = vsel %vm364, %v1084, 0
      %v1106 = vsel %vm364, %v1085, 0
      %v1109 = vsel %vm364, %v1086, 0
      %v1112 = vsel %vm364, %v1087, 0
      %v1115 = vsel %vm389, %v1089, 0
      %1117 = vmatprep.subr.mxu0 0.0
      %1118 = vmatpush1.msra.mxu0 %v1115
      %1119 = vmatprep.subr.mxu0 0.0
      %1120 = vmatpush1.msra.mxu0 0.0
      %1121 = vmatprep.subr.mxu0 0.0
      %1122 = vmatpush1.msra.mxu0 0.0
      %1123 = vmatprep.subr.mxu0 0.0
      %1124 = vmatpush1.msra.mxu0 0.0
      %1125 = vmatprep.subr.mxu0 0.0
      %1126 = vmatpush1.msra.mxu0 0.0
      %1127 = vmatprep.subr.mxu0 0.0
      %1128 = vmatpush1.msra.mxu0 0.0
      %1129 = vmatprep.subr.mxu0 0.0
      %1130 = vmatpush1.msra.mxu0 0.0
      %1131 = vmatprep.subr.mxu0 0.0
      %1132 = vmatpush1.msra.mxu0 0.0
      %1133 = vmatprep.subr.mxu0 0.0
      %1134 = vmatpush1.msra.mxu0 0.0
      %1135 = vmatprep.subr.mxu0 0.0
      %1136 = vmatpush1.msra.mxu0 0.0
      %1137 = vmatprep.subr.mxu0 0.0
      %1138 = vmatpush1.msra.mxu0 0.0
      %1139 = vmatprep.subr.mxu0 0.0
      %1140 = vmatpush1.msra.mxu0 0.0
      %1141 = vmatprep.subr.mxu0 0.0
      %1142 = vmatpush1.msra.mxu0 0.0
      %1143 = vmatprep.subr.mxu0 0.0
      %1144 = vmatpush1.msra.mxu0 0.0
      %1145 = vmatprep.subr.mxu0 0.0
      %1146 = vmatpush1.msra.mxu0 0.0
      %1147 = vmatprep.subr.mxu0 0.0
      %1148 = vmatpush1.msra.mxu0 0.0
      %1149 = vmatprep.subr.mxu0 0.0
      %1150 = vmatpush1.msra.mxu0 0.0
      %1151 = vmatprep.subr.mxu0 0.0
      %1152 = vmatpush1.msra.mxu0 0.0
      %1153 = vmatprep.subr.mxu0 0.0
      %1154 = vmatpush1.msra.mxu0 0.0
      %1155 = vmatprep.subr.mxu0 0.0
      %1156 = vmatpush1.msra.mxu0 0.0
      %1157 = vmatprep.subr.mxu0 0.0
      %1158 = vmatpush1.msra.mxu0 0.0
      %1159 = vmatprep.subr.mxu0 0.0
      %1160 = vmatpush1.msra.mxu0 0.0
      %1161 = vmatprep.subr.mxu0 0.0
      %1162 = vmatpush1.msra.mxu0 0.0
      %1163 = vmatprep.subr.mxu0 0.0
      %1164 = vmatpush1.msra.mxu0 0.0
      %1165 = vmatprep.subr.mxu0 0.0
      %1166 = vmatpush1.msra.mxu0 0.0
      %1167 = vmatprep.subr.mxu0 0.0
      %1168 = vmatpush1.msra.mxu0 0.0
      %1169 = vmatprep.subr.mxu0 0.0
      %1170 = vmatpush1.msra.mxu0 0.0
      %1171 = vmatprep.subr.mxu0 0.0
      %1172 = vmatpush1.msra.mxu0 0.0
      %1173 = vmatprep.subr.mxu0 0.0
      %1174 = vmatpush1.msra.mxu0 0.0
      %1175 = vmatprep.subr.mxu0 0.0
      %1176 = vmatpush1.msra.mxu0 0.0
      %1177 = vmatprep.subr.mxu0 0.0
      %1178 = vmatpush1.msra.mxu0 0.0
      %1179 = vmatprep.subr.mxu0 0.0
      %1180 = vmatpush1.msra.mxu0 0.0
      %1181 = vmatprep.mubr.f32.mxu0 0.0
      %1182 = vmatmul.mubr.f32.gmra.mrb[0].mxu0 %v1091
      %v1183 = vpop.f32.mrb[0].mxu0
      %v1184 = vadd.f32 0.0, %v1183
      %v1185 = vpop.f32.mrb[0].mxu0
      %1186 = vmatprep.mubr.f32.mxu0 0.0
      %1187 = vmatmul.mubr.f32.gmra.mrb[0].mxu0 %v1094
      %v1188 = vpop.f32.mrb[0].mxu0
      %v1189 = vadd.f32 0.0, %v1188
      %v1190 = vpop.f32.mrb[0].mxu0
      %1191 = vmatprep.mubr.f32.mxu0 0.0
      %1192 = vmatmul.mubr.f32.gmra.mrb[0].mxu0 %v1097
      %v1193 = vpop.f32.mrb[0].mxu0
      %v1194 = vadd.f32 0.0, %v1193
      %v1195 = vpop.f32.mrb[0].mxu0
      %1196 = vmatprep.mubr.f32.mxu0 0.0
      %1197 = vmatmul.mubr.f32.gmra.mrb[0].mxu0 %v1100
      %v1198 = vpop.f32.mrb[0].mxu0
      %v1199 = vadd.f32 0.0, %v1198
      %v1200 = vpop.f32.mrb[0].mxu0
      %1201 = vmatprep.mubr.f32.mxu0 0.0
      %1202 = vmatmul.mubr.f32.gmra.mrb[0].mxu0 %v1103
      %v1203 = vpop.f32.mrb[0].mxu0
      %v1204 = vadd.f32 0.0, %v1203
      %v1205 = vpop.f32.mrb[0].mxu0
      %1206 = vmatprep.mubr.f32.mxu0 0.0
      %1207 = vmatmul.mubr.f32.gmra.mrb[0].mxu0 %v1106
      %v1208 = vpop.f32.mrb[0].mxu0
      %v1209 = vadd.f32 0.0, %v1208
      %v1210 = vpop.f32.mrb[0].mxu0
      %1211 = vmatprep.mubr.f32.mxu0 0.0
      %1212 = vmatmul.mubr.f32.gmra.mrb[0].mxu0 %v1109
      %v1213 = vpop.f32.mrb[0].mxu0
      %v1214 = vadd.f32 0.0, %v1213
      %v1215 = vpop.f32.mrb[0].mxu0
      %1216 = vmatprep.mubr.f32.mxu0 0.0
      %1217 = vmatmul.mubr.f32.gmra.mrb[0].mxu0 %v1112
      %v1218 = vpop.f32.mrb[0].mxu0
      %v1219 = vadd.f32 0.0, %v1218
      %v1220 = vpop.f32.mrb[0].mxu0
      %1221 = vdwg.mxu0
      %v1222 = vadd.f32 %v1072, %v1184
      %v1223 = vadd.f32 %v1073, %v1189
      %v1224 = vadd.f32 %v1074, %v1194
      %v1225 = vadd.f32 %v1075, %v1199
      %v1226 = vadd.f32 %v1076, %v1204
      %v1227 = vadd.f32 %v1077, %v1209
      %v1228 = vadd.f32 %v1078, %v1214
      %v1229 = vadd.f32 %v1079, %v1219
      %v1230 = vld [vmem:[%s333] sm:$0xff]
      %v1231 = vld [vmem:[%s333 + $0x8] sm:$0xff]
      %v1232 = vld [vmem:[%s333 + $0x18] sm:$0xff]
      %v1233 = vld [vmem:[%s333 + $0x20] sm:$0xff]
      %v1234 = vld [vmem:[%s333 + $0x30] sm:$0xff]
      %v1235 = vld [vmem:[%s333 + $0x38] sm:$0xff]
      %v1236 = vld [vmem:[%s333 + $0x48] sm:$0xff]
      %v1237 = vld [vmem:[%s333 + $0x50] sm:$0xff]
      %s1238 = scalar_lea.vmem %s3, 24
      %v1239 = vld [vmem:[%s1238] sm:$0xf]
      %v1241 = vsel %vm364, %v1230, 0
      %v1244 = vsel %vm364, %v1231, 0
      %v1247 = vsel %vm364, %v1232, 0
      %v1250 = vsel %vm364, %v1233, 0
      %v1253 = vsel %vm364, %v1234, 0
      %v1256 = vsel %vm364, %v1235, 0
      %v1259 = vsel %vm364, %v1236, 0
      %v1262 = vsel %vm364, %v1237, 0
      %v1265 = vsel %vm389, %v1239, 0
      %1267 = vmatprep.subr.mxu0 0.0
      %1268 = vmatpush1.msra.mxu0 %v1265
      %1269 = vmatprep.subr.mxu0 0.0
      %1270 = vmatpush1.msra.mxu0 0.0
      %1271 = vmatprep.subr.mxu0 0.0
      %1272 = vmatpush1.msra.mxu0 0.0
      %1273 = vmatprep.subr.mxu0 0.0
      %1274 = vmatpush1.msra.mxu0 0.0
      %1275 = vmatprep.subr.mxu0 0.0
      %1276 = vmatpush1.msra.mxu0 0.0
      %1277 = vmatprep.subr.mxu0 0.0
      %1278 = vmatpush1.msra.mxu0 0.0
      %1279 = vmatprep.subr.mxu0 0.0
      %1280 = vmatpush1.msra.mxu0 0.0
      %1281 = vmatprep.subr.mxu0 0.0
      %1282 = vmatpush1.msra.mxu0 0.0
      %1283 = vmatprep.subr.mxu0 0.0
      %1284 = vmatpush1.msra.mxu0 0.0
      %1285 = vmatprep.subr.mxu0 0.0
      %1286 = vmatpush1.msra.mxu0 0.0
      %1287 = vmatprep.subr.mxu0 0.0
      %1288 = vmatpush1.msra.mxu0 0.0
      %1289 = vmatprep.subr.mxu0 0.0
      %1290 = vmatpush1.msra.mxu0 0.0
      %1291 = vmatprep.subr.mxu0 0.0
      %1292 = vmatpush1.msra.mxu0 0.0
      %1293 = vmatprep.subr.mxu0 0.0
      %1294 = vmatpush1.msra.mxu0 0.0
      %1295 = vmatprep.subr.mxu0 0.0
      %1296 = vmatpush1.msra.mxu0 0.0
      %1297 = vmatprep.subr.mxu0 0.0
      %1298 = vmatpush1.msra.mxu0 0.0
      %1299 = vmatprep.subr.mxu0 0.0
      %1300 = vmatpush1.msra.mxu0 0.0
      %1301 = vmatprep.subr.mxu0 0.0
      %1302 = vmatpush1.msra.mxu0 0.0
      %1303 = vmatprep.subr.mxu0 0.0
      %1304 = vmatpush1.msra.mxu0 0.0
      %1305 = vmatprep.subr.mxu0 0.0
      %1306 = vmatpush1.msra.mxu0 0.0
      %1307 = vmatprep.subr.mxu0 0.0
      %1308 = vmatpush1.msra.mxu0 0.0
      %1309 = vmatprep.subr.mxu0 0.0
      %1310 = vmatpush1.msra.mxu0 0.0
      %1311 = vmatprep.subr.mxu0 0.0
      %1312 = vmatpush1.msra.mxu0 0.0
      %1313 = vmatprep.subr.mxu0 0.0
      %1314 = vmatpush1.msra.mxu0 0.0
      %1315 = vmatprep.subr.mxu0 0.0
      %1316 = vmatpush1.msra.mxu0 0.0
      %1317 = vmatprep.subr.mxu0 0.0
      %1318 = vmatpush1.msra.mxu0 0.0
      %1319 = vmatprep.subr.mxu0 0.0
      %1320 = vmatpush1.msra.mxu0 0.0
      %1321 = vmatprep.subr.mxu0 0.0
      %1322 = vmatpush1.msra.mxu0 0.0
      %1323 = vmatprep.subr.mxu0 0.0
      %1324 = vmatpush1.msra.mxu0 0.0
      %1325 = vmatprep.subr.mxu0 0.0
      %1326 = vmatpush1.msra.mxu0 0.0
      %1327 = vmatprep.subr.mxu0 0.0
      %1328 = vmatpush1.msra.mxu0 0.0
      %1329 = vmatprep.subr.mxu0 0.0
      %1330 = vmatpush1.msra.mxu0 0.0
      %1331 = vmatprep.mubr.f32.mxu0 0.0
      %1332 = vmatmul.mubr.f32.gmra.mrb[0].mxu0 %v1241
      %v1333 = vpop.f32.mrb[0].mxu0
      %v1334 = vadd.f32 0.0, %v1333
      %v1335 = vpop.f32.mrb[0].mxu0
      %1336 = vmatprep.mubr.f32.mxu0 0.0
      %1337 = vmatmul.mubr.f32.gmra.mrb[0].mxu0 %v1244
      %v1338 = vpop.f32.mrb[0].mxu0
      %v1339 = vadd.f32 0.0, %v1338
      %v1340 = vpop.f32.mrb[0].mxu0
      %1341 = vmatprep.mubr.f32.mxu0 0.0
      %1342 = vmatmul.mubr.f32.gmra.mrb[0].mxu0 %v1247
      %v1343 = vpop.f32.mrb[0].mxu0
      %v1344 = vadd.f32 0.0, %v1343
      %v1345 = vpop.f32.mrb[0].mxu0
      %1346 = vmatprep.mubr.f32.mxu0 0.0
      %1347 = vmatmul.mubr.f32.gmra.mrb[0].mxu0 %v1250
      %v1348 = vpop.f32.mrb[0].mxu0
      %v1349 = vadd.f32 0.0, %v1348
      %v1350 = vpop.f32.mrb[0].mxu0
      %1351 = vmatprep.mubr.f32.mxu0 0.0
      %1352 = vmatmul.mubr.f32.gmra.mrb[0].mxu0 %v1253
      %v1353 = vpop.f32.mrb[0].mxu0
      %v1354 = vadd.f32 0.0, %v1353
      %v1355 = vpop.f32.mrb[0].mxu0
      %1356 = vmatprep.mubr.f32.mxu0 0.0
      %1357 = vmatmul.mubr.f32.gmra.mrb[0].mxu0 %v1256
      %v1358 = vpop.f32.mrb[0].mxu0
      %v1359 = vadd.f32 0.0, %v1358
      %v1360 = vpop.f32.mrb[0].mxu0
      %1361 = vmatprep.mubr.f32.mxu0 0.0
      %1362 = vmatmul.mubr.f32.gmra.mrb[0].mxu0 %v1259
      %v1363 = vpop.f32.mrb[0].mxu0
      %v1364 = vadd.f32 0.0, %v1363
      %v1365 = vpop.f32.mrb[0].mxu0
      %1366 = vmatprep.mubr.f32.mxu0 0.0
      %1367 = vmatmul.mubr.f32.gmra.mrb[0].mxu0 %v1262
      %v1368 = vpop.f32.mrb[0].mxu0
      %v1369 = vadd.f32 0.0, %v1368
      %v1370 = vpop.f32.mrb[0].mxu0
      %1371 = vdwg.mxu0
      %v1372 = vadd.f32 %v1222, %v1334
      %v1373 = vadd.f32 %v1223, %v1339
      %v1374 = vadd.f32 %v1224, %v1344
      %v1375 = vadd.f32 %v1225, %v1349
      %v1376 = vadd.f32 %v1226, %v1354
      %v1377 = vadd.f32 %v1227, %v1359
      %v1378 = vadd.f32 %v1228, %v1364
      %v1379 = vadd.f32 %v1229, %v1369
      %v1380 = vld [vmem:[%s333 + $0x1] sm:$0xff]
      %v1381 = vld [vmem:[%s333 + $0x9] sm:$0xff]
      %v1382 = vld [vmem:[%s333 + $0x19] sm:$0xff]
      %v1383 = vld [vmem:[%s333 + $0x21] sm:$0xff]
      %v1384 = vld [vmem:[%s333 + $0x31] sm:$0xff]
      %v1385 = vld [vmem:[%s333 + $0x39] sm:$0xff]
      %v1386 = vld [vmem:[%s333 + $0x49] sm:$0xff]
      %v1387 = vld [vmem:[%s333 + $0x51] sm:$0xff]
      %s1388 = scalar_lea.vmem %s3, 28
      %v1389 = vld [vmem:[%s1388] sm:$0xf]
      %v1391 = vsel %vm364, %v1380, 0
      %v1394 = vsel %vm364, %v1381, 0
      %v1397 = vsel %vm364, %v1382, 0
      %v1400 = vsel %vm364, %v1383, 0
      %v1403 = vsel %vm364, %v1384, 0
      %v1406 = vsel %vm364, %v1385, 0
      %v1409 = vsel %vm364, %v1386, 0
      %v1412 = vsel %vm364, %v1387, 0
      %v1415 = vsel %vm389, %v1389, 0
      %1417 = vmatprep.subr.mxu0 0.0
      %1418 = vmatpush1.msra.mxu0 %v1415
      %1419 = vmatprep.subr.mxu0 0.0
      %1420 = vmatpush1.msra.mxu0 0.0
      %1421 = vmatprep.subr.mxu0 0.0
      %1422 = vmatpush1.msra.mxu0 0.0
      %1423 = vmatprep.subr.mxu0 0.0
      %1424 = vmatpush1.msra.mxu0 0.0
      %1425 = vmatprep.subr.mxu0 0.0
      %1426 = vmatpush1.msra.mxu0 0.0
      %1427 = vmatprep.subr.mxu0 0.0
      %1428 = vmatpush1.msra.mxu0 0.0
      %1429 = vmatprep.subr.mxu0 0.0
      %1430 = vmatpush1.msra.mxu0 0.0
      %1431 = vmatprep.subr.mxu0 0.0
      %1432 = vmatpush1.msra.mxu0 0.0
      %1433 = vmatprep.subr.mxu0 0.0
      %1434 = vmatpush1.msra.mxu0 0.0
      %1435 = vmatprep.subr.mxu0 0.0
      %1436 = vmatpush1.msra.mxu0 0.0
      %1437 = vmatprep.subr.mxu0 0.0
      %1438 = vmatpush1.msra.mxu0 0.0
      %1439 = vmatprep.subr.mxu0 0.0
      %1440 = vmatpush1.msra.mxu0 0.0
      %1441 = vmatprep.subr.mxu0 0.0
      %1442 = vmatpush1.msra.mxu0 0.0
      %1443 = vmatprep.subr.mxu0 0.0
      %1444 = vmatpush1.msra.mxu0 0.0
      %1445 = vmatprep.subr.mxu0 0.0
      %1446 = vmatpush1.msra.mxu0 0.0
      %1447 = vmatprep.subr.mxu0 0.0
      %1448 = vmatpush1.msra.mxu0 0.0
      %1449 = vmatprep.subr.mxu0 0.0
      %1450 = vmatpush1.msra.mxu0 0.0
      %1451 = vmatprep.subr.mxu0 0.0
      %1452 = vmatpush1.msra.mxu0 0.0
      %1453 = vmatprep.subr.mxu0 0.0
      %1454 = vmatpush1.msra.mxu0 0.0
      %1455 = vmatprep.subr.mxu0 0.0
      %1456 = vmatpush1.msra.mxu0 0.0
      %1457 = vmatprep.subr.mxu0 0.0
      %1458 = vmatpush1.msra.mxu0 0.0
      %1459 = vmatprep.subr.mxu0 0.0
      %1460 = vmatpush1.msra.mxu0 0.0
      %1461 = vmatprep.subr.mxu0 0.0
      %1462 = vmatpush1.msra.mxu0 0.0
      %1463 = vmatprep.subr.mxu0 0.0
      %1464 = vmatpush1.msra.mxu0 0.0
      %1465 = vmatprep.subr.mxu0 0.0
      %1466 = vmatpush1.msra.mxu0 0.0
      %1467 = vmatprep.subr.mxu0 0.0
      %1468 = vmatpush1.msra.mxu0 0.0
      %1469 = vmatprep.subr.mxu0 0.0
      %1470 = vmatpush1.msra.mxu0 0.0
      %1471 = vmatprep.subr.mxu0 0.0
      %1472 = vmatpush1.msra.mxu0 0.0
      %1473 = vmatprep.subr.mxu0 0.0
      %1474 = vmatpush1.msra.mxu0 0.0
      %1475 = vmatprep.subr.mxu0 0.0
      %1476 = vmatpush1.msra.mxu0 0.0
      %1477 = vmatprep.subr.mxu0 0.0
      %1478 = vmatpush1.msra.mxu0 0.0
      %1479 = vmatprep.subr.mxu0 0.0
      %1480 = vmatpush1.msra.mxu0 0.0
      %1481 = vmatprep.mubr.f32.mxu0 0.0
      %1482 = vmatmul.mubr.f32.gmra.mrb[0].mxu0 %v1391
      %v1483 = vpop.f32.mrb[0].mxu0
      %v1484 = vadd.f32 0.0, %v1483
      %v1485 = vpop.f32.mrb[0].mxu0
      %1486 = vmatprep.mubr.f32.mxu0 0.0
      %1487 = vmatmul.mubr.f32.gmra.mrb[0].mxu0 %v1394
      %v1488 = vpop.f32.mrb[0].mxu0
      %v1489 = vadd.f32 0.0, %v1488
      %v1490 = vpop.f32.mrb[0].mxu0
      %1491 = vmatprep.mubr.f32.mxu0 0.0
      %1492 = vmatmul.mubr.f32.gmra.mrb[0].mxu0 %v1397
      %v1493 = vpop.f32.mrb[0].mxu0
      %v1494 = vadd.f32 0.0, %v1493
      %v1495 = vpop.f32.mrb[0].mxu0
      %1496 = vmatprep.mubr.f32.mxu0 0.0
      %1497 = vmatmul.mubr.f32.gmra.mrb[0].mxu0 %v1400
      %v1498 = vpop.f32.mrb[0].mxu0
      %v1499 = vadd.f32 0.0, %v1498
      %v1500 = vpop.f32.mrb[0].mxu0
      %1501 = vmatprep.mubr.f32.mxu0 0.0
      %1502 = vmatmul.mubr.f32.gmra.mrb[0].mxu0 %v1403
      %v1503 = vpop.f32.mrb[0].mxu0
      %v1504 = vadd.f32 0.0, %v1503
      %v1505 = vpop.f32.mrb[0].mxu0
      %1506 = vmatprep.mubr.f32.mxu0 0.0
      %1507 = vmatmul.mubr.f32.gmra.mrb[0].mxu0 %v1406
      %v1508 = vpop.f32.mrb[0].mxu0
      %v1509 = vadd.f32 0.0, %v1508
      %v1510 = vpop.f32.mrb[0].mxu0
      %1511 = vmatprep.mubr.f32.mxu0 0.0
      %1512 = vmatmul.mubr.f32.gmra.mrb[0].mxu0 %v1409
      %v1513 = vpop.f32.mrb[0].mxu0
      %v1514 = vadd.f32 0.0, %v1513
      %v1515 = vpop.f32.mrb[0].mxu0
      %1516 = vmatprep.mubr.f32.mxu0 0.0
      %1517 = vmatmul.mubr.f32.gmra.mrb[0].mxu0 %v1412
      %v1518 = vpop.f32.mrb[0].mxu0
      %v1519 = vadd.f32 0.0, %v1518
      %v1520 = vpop.f32.mrb[0].mxu0
      %1521 = vdwg.mxu0
      %v1522 = vadd.f32 %v1372, %v1484
      %v1523 = vadd.f32 %v1373, %v1489
      %v1524 = vadd.f32 %v1374, %v1494
      %v1525 = vadd.f32 %v1375, %v1499
      %v1526 = vadd.f32 %v1376, %v1504
      %v1527 = vadd.f32 %v1377, %v1509
      %v1528 = vadd.f32 %v1378, %v1514
      %v1529 = vadd.f32 %v1379, %v1519
      %v1530 = vld [vmem:[%s333 + $0x2] sm:$0xff]
      %v1531 = vld [vmem:[%s333 + $0xa] sm:$0xff]
      %v1532 = vld [vmem:[%s333 + $0x1a] sm:$0xff]
      %v1533 = vld [vmem:[%s333 + $0x22] sm:$0xff]
      %v1534 = vld [vmem:[%s333 + $0x32] sm:$0xff]
      %v1535 = vld [vmem:[%s333 + $0x3a] sm:$0xff]
      %v1536 = vld [vmem:[%s333 + $0x4a] sm:$0xff]
      %v1537 = vld [vmem:[%s333 + $0x52] sm:$0xff]
      %s1538 = scalar_lea.vmem %s3, 32
      %v1539 = vld [vmem:[%s1538] sm:$0xf]
      %v1541 = vsel %vm364, %v1530, 0
      %v1544 = vsel %vm364, %v1531, 0
      %v1547 = vsel %vm364, %v1532, 0
      %v1550 = vsel %vm364, %v1533, 0
      %v1553 = vsel %vm364, %v1534, 0
      %v1556 = vsel %vm364, %v1535, 0
      %v1559 = vsel %vm364, %v1536, 0
      %v1562 = vsel %vm364, %v1537, 0
      %v1565 = vsel %vm389, %v1539, 0
      %1567 = vmatprep.subr.mxu0 0.0
      %1568 = vmatpush1.msra.mxu0 %v1565
      %1569 = vmatprep.subr.mxu0 0.0
      %1570 = vmatpush1.msra.mxu0 0.0
      %1571 = vmatprep.subr.mxu0 0.0
      %1572 = vmatpush1.msra.mxu0 0.0
      %1573 = vmatprep.subr.mxu0 0.0
      %1574 = vmatpush1.msra.mxu0 0.0
      %1575 = vmatprep.subr.mxu0 0.0
      %1576 = vmatpush1.msra.mxu0 0.0
      %1577 = vmatprep.subr.mxu0 0.0
      %1578 = vmatpush1.msra.mxu0 0.0
      %1579 = vmatprep.subr.mxu0 0.0
      %1580 = vmatpush1.msra.mxu0 0.0
      %1581 = vmatprep.subr.mxu0 0.0
      %1582 = vmatpush1.msra.mxu0 0.0
      %1583 = vmatprep.subr.mxu0 0.0
      %1584 = vmatpush1.msra.mxu0 0.0
      %1585 = vmatprep.subr.mxu0 0.0
      %1586 = vmatpush1.msra.mxu0 0.0
      %1587 = vmatprep.subr.mxu0 0.0
      %1588 = vmatpush1.msra.mxu0 0.0
      %1589 = vmatprep.subr.mxu0 0.0
      %1590 = vmatpush1.msra.mxu0 0.0
      %1591 = vmatprep.subr.mxu0 0.0
      %1592 = vmatpush1.msra.mxu0 0.0
      %1593 = vmatprep.subr.mxu0 0.0
      %1594 = vmatpush1.msra.mxu0 0.0
      %1595 = vmatprep.subr.mxu0 0.0
      %1596 = vmatpush1.msra.mxu0 0.0
      %1597 = vmatprep.subr.mxu0 0.0
      %1598 = vmatpush1.msra.mxu0 0.0
      %1599 = vmatprep.subr.mxu0 0.0
      %1600 = vmatpush1.msra.mxu0 0.0
      %1601 = vmatprep.subr.mxu0 0.0
      %1602 = vmatpush1.msra.mxu0 0.0
      %1603 = vmatprep.subr.mxu0 0.0
      %1604 = vmatpush1.msra.mxu0 0.0
      %1605 = vmatprep.subr.mxu0 0.0
      %1606 = vmatpush1.msra.mxu0 0.0
      %1607 = vmatprep.subr.mxu0 0.0
      %1608 = vmatpush1.msra.mxu0 0.0
      %1609 = vmatprep.subr.mxu0 0.0
      %1610 = vmatpush1.msra.mxu0 0.0
      %1611 = vmatprep.subr.mxu0 0.0
      %1612 = vmatpush1.msra.mxu0 0.0
      %1613 = vmatprep.subr.mxu0 0.0
      %1614 = vmatpush1.msra.mxu0 0.0
      %1615 = vmatprep.subr.mxu0 0.0
      %1616 = vmatpush1.msra.mxu0 0.0
      %1617 = vmatprep.subr.mxu0 0.0
      %1618 = vmatpush1.msra.mxu0 0.0
      %1619 = vmatprep.subr.mxu0 0.0
      %1620 = vmatpush1.msra.mxu0 0.0
      %1621 = vmatprep.subr.mxu0 0.0
      %1622 = vmatpush1.msra.mxu0 0.0
      %1623 = vmatprep.subr.mxu0 0.0
      %1624 = vmatpush1.msra.mxu0 0.0
      %1625 = vmatprep.subr.mxu0 0.0
      %1626 = vmatpush1.msra.mxu0 0.0
      %1627 = vmatprep.subr.mxu0 0.0
      %1628 = vmatpush1.msra.mxu0 0.0
      %1629 = vmatprep.subr.mxu0 0.0
      %1630 = vmatpush1.msra.mxu0 0.0
      %1631 = vmatprep.mubr.f32.mxu0 0.0
      %1632 = vmatmul.mubr.f32.gmra.mrb[0].mxu0 %v1541
      %v1633 = vpop.f32.mrb[0].mxu0
      %v1634 = vadd.f32 0.0, %v1633
      %v1635 = vpop.f32.mrb[0].mxu0
      %1636 = vmatprep.mubr.f32.mxu0 0.0
      %1637 = vmatmul.mubr.f32.gmra.mrb[0].mxu0 %v1544
      %v1638 = vpop.f32.mrb[0].mxu0
      %v1639 = vadd.f32 0.0, %v1638
      %v1640 = vpop.f32.mrb[0].mxu0
      %1641 = vmatprep.mubr.f32.mxu0 0.0
      %1642 = vmatmul.mubr.f32.gmra.mrb[0].mxu0 %v1547
      %v1643 = vpop.f32.mrb[0].mxu0
      %v1644 = vadd.f32 0.0, %v1643
      %v1645 = vpop.f32.mrb[0].mxu0
      %1646 = vmatprep.mubr.f32.mxu0 0.0
      %1647 = vmatmul.mubr.f32.gmra.mrb[0].mxu0 %v1550
      %v1648 = vpop.f32.mrb[0].mxu0
      %v1649 = vadd.f32 0.0, %v1648
      %v1650 = vpop.f32.mrb[0].mxu0
      %1651 = vmatprep.mubr.f32.mxu0 0.0
      %1652 = vmatmul.mubr.f32.gmra.mrb[0].mxu0 %v1553
      %v1653 = vpop.f32.mrb[0].mxu0
      %v1654 = vadd.f32 0.0, %v1653
      %v1655 = vpop.f32.mrb[0].mxu0
      %1656 = vmatprep.mubr.f32.mxu0 0.0
      %1657 = vmatmul.mubr.f32.gmra.mrb[0].mxu0 %v1556
      %v1658 = vpop.f32.mrb[0].mxu0
      %v1659 = vadd.f32 0.0, %v1658
      %v1660 = vpop.f32.mrb[0].mxu0
      %1661 = vmatprep.mubr.f32.mxu0 0.0
      %1662 = vmatmul.mubr.f32.gmra.mrb[0].mxu0 %v1559
      %v1663 = vpop.f32.mrb[0].mxu0
      %v1664 = vadd.f32 0.0, %v1663
      %v1665 = vpop.f32.mrb[0].mxu0
      %1666 = vmatprep.mubr.f32.mxu0 0.0
      %1667 = vmatmul.mubr.f32.gmra.mrb[0].mxu0 %v1562
      %v1668 = vpop.f32.mrb[0].mxu0
      %v1669 = vadd.f32 0.0, %v1668
      %v1670 = vpop.f32.mrb[0].mxu0
      %1671 = vdwg.mxu0
      %v1672 = vadd.f32 %v1522, %v1634
      %v1673 = vadd.f32 %v1523, %v1639
      %v1674 = vadd.f32 %v1524, %v1644
      %v1675 = vadd.f32 %v1525, %v1649
      %v1676 = vadd.f32 %v1526, %v1654
      %v1677 = vadd.f32 %v1527, %v1659
      %v1678 = vadd.f32 %v1528, %v1664
      %v1679 = vadd.f32 %v1529, %v1669
      %v1680 = vld [vmem:[%s4] sm:$0x1]
      %v1682 = vlaneseq
      %v1683 = vshrl.u32 %v1682, 7
      %v1684 = vsub.s32 0, %v1683
      %v1685 = vrot.slane %v1680, %v1684
      %v1687 = vadd.f32 %v1672, %v1685
      %v1688 = vadd.f32 %v1673, %v1685
      %v1689 = vadd.f32 %v1674, %v1685
      %v1690 = vadd.f32 %v1675, %v1685
      %v1691 = vadd.f32 %v1676, %v1685
      %v1692 = vadd.f32 %v1677, %v1685
      %v1693 = vadd.f32 %v1678, %v1685
      %v1694 = vadd.f32 %v1679, %v1685
      %vm1695 = vcmp.ge.f32.partialorder %v1687, 0.0
      %vm1696 = vcmp.ge.f32.partialorder %v1688, 0.0
      %vm1697 = vcmp.ge.f32.partialorder %v1689, 0.0
      %vm1698 = vcmp.ge.f32.partialorder %v1690, 0.0
      %vm1699 = vcmp.ge.f32.partialorder %v1691, 0.0
      %vm1700 = vcmp.ge.f32.partialorder %v1692, 0.0
      %vm1701 = vcmp.ge.f32.partialorder %v1693, 0.0
      %vm1702 = vcmp.ge.f32.partialorder %v1694, 0.0
      %v1703 = vmul.f32 %v1687, 0.01
      %v1704 = vmul.f32 %v1688, 0.01
      %v1705 = vmul.f32 %v1689, 0.01
      %v1706 = vmul.f32 %v1690, 0.01
      %v1707 = vmul.f32 %v1691, 0.01
      %v1708 = vmul.f32 %v1692, 0.01
      %v1709 = vmul.f32 %v1693, 0.01
      %v1710 = vmul.f32 %v1694, 0.01
      %v1711 = vsel %vm1695, %v1687, %v1703
      %v1712 = vsel %vm1696, %v1688, %v1704
      %v1713 = vsel %vm1697, %v1689, %v1705
      %v1714 = vsel %vm1698, %v1690, %v1706
      %v1715 = vsel %vm1699, %v1691, %v1707
      %v1716 = vsel %vm1700, %v1692, %v1708
      %v1717 = vsel %vm1701, %v1693, %v1709
      %v1718 = vsel %vm1702, %v1694, %v1710
      %vm1719 = vcmask 261120
      %1720 = vst.msk [vmem:[%s343] sm:$0xff] %vm1719, %v1711
      %1721 = vst.msk [vmem:[%s343 + $0x8] sm:$0xff] %vm1719, %v1712
      %1722 = vst.msk [vmem:[%s343 + $0x10] sm:$0xff] %vm1719, %v1713
      %1723 = vst.msk [vmem:[%s343 + $0x18] sm:$0xff] %vm1719, %v1714
      %1724 = vst.msk [vmem:[%s343 + $0x20] sm:$0xff] %vm1719, %v1715
      %1725 = vst.msk [vmem:[%s343 + $0x28] sm:$0xff] %vm1719, %v1716
      %1726 = vst.msk [vmem:[%s343 + $0x30] sm:$0xff] %vm1719, %v1717
      %1727 = vst.msk [vmem:[%s343 + $0x38] sm:$0xff] %vm1719, %v1718
      %s1728 = smul.u32 8, %s21
      %p1729 = scmp.lt.s32.totalorder %s20, 1
      %s1730 = scalar_select %p1729, %s20, 1
      %p1731 = scmp.lt.s32.totalorder %s1728, 31
      %s1732 = scalar_select %p1731, %s1728, 31
      %s1733 = smul.addr %s1730, 32
      %s1734 = sadd.s32 %s1732, %s1733
      %s1735 = smul.addr %s1734, 8
      %s1736 = scalar_lea.vmem %s5, %s1735
      // Predicated region
      $region41: #{input_proj.1} parent=39 // pred_check
        %p1737 = pneg %p174
      $region42: #{input_proj.1} parent=39 // pred_check_branch
        %1739 = sbr.rel (%p1737) target = $region44
      $region43: #{input_proj.1} parent=39 // pred_region
        %s1740 = smul.u32 8, %s21
      $region44: #{input_proj.1} parent=39 // pred_fallthru
        _
    $region40: #{input_proj.1} parent=5 // pred_fallthru
      _
    %p1741 = scmp.le.s32.totalorder 2, %s11
    // Predicated region
    $region45: #{input_proj.1} parent=5 // pred_check
      %p1742 = pneg %p1741
    $region46: #{input_proj.1} parent=5 // pred_check_branch
      %1744 = sbr.rel (%p1742) target = $region48
    $region47: #{input_proj.1} parent=5 // pred_region
      %s1745 = ssub.s32 %s11, 2
      // Predicated region
      $region49: #{input_proj.1} parent=47 // pred_check
        %p1746 = pneg %p180
      $region50: #{input_proj.1} parent=47 // pred_check_branch
        %1748 = sbr.rel (%p1746) target = $region52
      $region51: #{input_proj.1} parent=47 // pred_region
        %s1749 = smul.u32 8, %s23
        %p1750 = scmp.lt.s32.totalorder %s22, 1
        %s1751 = scalar_select %p1750, %s22, 1
        %p1752 = scmp.lt.s32.totalorder %s1749, 31
        %s1753 = scalar_select %p1752, %s1749, 31
        %s1754 = smul.addr %s1751, 32
        %s1755 = sadd.s32 %s1753, %s1754
        %s1756 = smul.addr %s1755, 8
        %s1757 = scalar_lea.vmem %s5, %s1756
      $region52: #{input_proj.1} parent=47 // pred_fallthru
        _
    $region48: #{input_proj.1} parent=5 // pred_fallthru
      _
  $region6: #{input_proj.1} parent=0 // loop_footer
    %s15 = sadd.s32 1, %s11
  $region7: #{input_proj.1} parent=0 // loop_footer_branch
    %10 = sbr.rel target = $region3
  $region8: #{input_proj.1} parent=0 // loop_exit
    _

</llo_original>
